<compile_context>
chip_gen: v7x
topology: tpu7x:2x2x1
jax: 0.10.0
libtpu: 0.0.40
codegen_flags: <defaults>
</compile_context>

<pallas_src>
import functools

import jax
import jax.numpy as jnp
from jax.experimental import pallas as pl
from jax.experimental.pallas import tpu as pltpu


ROW_TILE = 8  # output rows per grid step (M dim of the Toeplitz matmuls)


# ---------------------------------------------------------------------------
# Kernel 1: fused conv3x3 + conv5x5 (reflect pad done once in glue, 3x3 branch
# zero-embedded into the 5x5 kernel) + per-channel sum / sumsq epilogue for BN.
#
#   xp_ref : (1, Hp, Wp*Cin)       f32   padded input image, channels-minor
#   w_ref  : (KH, Wp*Cin, W*Ctot)  bf16  row-Toeplitz weights (both branches)
#   y_ref  : (1, RT, W*Ctot)       f32   conv output tile, lane-dense
#   s_ref  : (1, 2, W*Ctot)        f32   per-(w, conv-channel) sum / sumsq,
#                                        resident across the row-tile grid axis
# ---------------------------------------------------------------------------
def _conv_stats_kernel(xp_ref, w_ref, y_ref, s_ref, *, KH, RT):
    rt = pl.program_id(1)

    @pl.when(rt == 0)
    def _():
        s_ref[...] = jnp.zeros_like(s_ref)

    h0 = pl.multiple_of(rt * RT, RT)
    acc = jnp.zeros(y_ref.shape[1:], jnp.float32)            # (RT, W*Ctot)
    for i in range(KH):                                      # static unroll (5)
        rows = xp_ref[0, pl.ds(h0 + i, RT), :].astype(jnp.bfloat16)
        acc += jnp.dot(rows, w_ref[i], preferred_element_type=jnp.float32)

    y_ref[0] = acc.astype(y_ref.dtype)
    # BatchNorm batch statistics, accumulated here so no extra pass over y.
    s_ref[0, 0:1, :] += jnp.sum(acc, axis=0, keepdims=True)
    s_ref[0, 1:2, :] += jnp.sum(acc * acc, axis=0, keepdims=True)


def fused_conv_and_stats(xp_flat, w_toe, H, W, Ctot):
    N, Hp, WpC = xp_flat.shape
    KH = w_toe.shape[0]
    RT = ROW_TILE
    assert H % RT == 0, "H must be a multiple of ROW_TILE"
    n_rt = H // RT
    kern = functools.partial(_conv_stats_kernel, KH=KH, RT=RT)
    y, s = pl.pallas_call(
        kern,
        out_shape=(
            jax.ShapeDtypeStruct((N, H, W * Ctot), jnp.float32),
            jax.ShapeDtypeStruct((N, 2, W * Ctot), jnp.float32),
        ),
        grid=(N, n_rt),
        in_specs=[
            pl.BlockSpec((1, Hp, WpC), lambda n, r: (n, 0, 0)),
            pl.BlockSpec((KH, WpC, W * Ctot), lambda n, r: (0, 0, 0)),
        ],
        out_specs=(
            pl.BlockSpec((1, RT, W * Ctot), lambda n, r: (n, r, 0)),
            pl.BlockSpec((1, 2, W * Ctot), lambda n, r: (n, 0, 0)),
        ),
        compiler_params=pltpu.CompilerParams(
            dimension_semantics=("parallel", "arbitrary")),
    )(xp_flat, w_toe)
    return y, s


# ---------------------------------------------------------------------------
# Kernel 2: fused BatchNorm affine + ReLU, fully lane-dense I/O.
# scale/bias are pre-broadcast to (1, W*Ctot) rows in the wrapper.
# ---------------------------------------------------------------------------
def _bn_relu_kernel(y_ref, scale_ref, bias_ref, o_ref):
    o_ref[...] = jnp.maximum(
        y_ref[...] * scale_ref[...] + bias_ref[...], 0.0).astype(o_ref.dtype)


def bn_relu(y_flat, scale_row, bias_row):
    R, L = y_flat.shape
    RT = ROW_TILE
    assert R % RT == 0
    return pl.pallas_call(
        _bn_relu_kernel,
        out_shape=jax.ShapeDtypeStruct((R, L), y_flat.dtype),
        grid=(R // RT,),
        in_specs=[
            pl.BlockSpec((RT, L), lambda i: (i, 0)),
            pl.BlockSpec((1, L), lambda i: (0, 0)),
            pl.BlockSpec((1, L), lambda i: (0, 0)),
        ],
        out_specs=pl.BlockSpec((RT, L), lambda i: (i, 0)),
        compiler_params=pltpu.CompilerParams(dimension_semantics=("parallel",)),
    )(y_flat, scale_row, bias_row)


# ---------------------------------------------------------------------------
# Weight preprocessing (tiny tensors, done once in the wrapper).
# ---------------------------------------------------------------------------
def _combined_weight(w3_hwio, w5_hwio):
    """Zero-embed 3x3 into 5x5 and reorder output channels to
    k = t*2Cp + branch*Cp + src with t = i*2 + j, so PixelShuffle + concat
    become a pure final reshape/transpose."""
    KH, KW, Cin, C4 = w5_hwio.shape            # (5, 5, Cin, 4*Cp)
    Cp = C4 // 4
    w3p = jnp.pad(w3_hwio, ((1, 1), (1, 1), (0, 0), (0, 0)))   # 3x3 -> 5x5
    wb = jnp.stack([w3p, w5_hwio], axis=3)                     # (5,5,Cin,2,4Cp)
    wb = wb.reshape(KH, KW, Cin, 2, Cp, 2, 2)                  # (.., b, src, i, j)
    wb = jnp.transpose(wb, (0, 1, 2, 5, 6, 3, 4))              # (.., i, j, b, src)
    return wb.reshape(KH, KW, Cin, 8 * Cp)                     # k = t*2Cp + b*Cp + src


def _toeplitz_weight(w_comb, W):
    """(KH, KW, Cin, Ctot) -> (KH, Wp*Cin, W*Ctot) row-Toeplitz matrices so each
    conv kernel-row contribution is one wide MXU matmul."""
    KH, KW, Cin, Ctot = w_comb.shape
    Wp = W + KW - 1
    t = jnp.zeros((KH, Wp * Cin, W * Ctot), w_comb.dtype)
    for w in range(W):
        for j in range(KW):
            t = t.at[:, (w + j) * Cin:(w + j + 1) * Cin,
                     w * Ctot:(w + 1) * Ctot].set(w_comb[:, j])
    return t


# ---------------------------------------------------------------------------
# Full forward pass (NCHW in / NCHW out, matching the PyTorch module).
# ---------------------------------------------------------------------------
@jax.jit
def variable_filter_size_up_block(x_nchw, w3_hwio, w5_hwio, gamma, beta,
                                  eps=1e-5):
    N, Cin, H, W = x_nchw.shape
    Cp = gamma.shape[0] // 2                    # out_channels_per_conv
    Ctot = 8 * Cp                               # 4*Cp per branch, 2 branches
    KW = 5
    Wp = W + KW - 1

    # Input: NCHW -> NHWC, one shared reflect pad (pad=2), flatten (W, Cin)
    # into a lane-dense row of length Wp*Cin.
    x_nhwc = jnp.transpose(x_nchw, (0, 2, 3, 1))
    xp = jnp.pad(x_nhwc, ((0, 0), (2, 2), (2, 2), (0, 0)), mode="reflect")
    xp_flat = xp.reshape(N, H + 4, Wp * Cin).astype(jnp.float32)

    # Weights: fuse branches, reorder channels, Toeplitz-expand, cast to bf16.
    w_comb = _combined_weight(w3_hwio, w5_hwio)
    w_toe = _toeplitz_weight(w_comb, W).astype(jnp.bfloat16)

    # Kernel 1: both convs + per-channel sum / sumsq.
    y, s = fused_conv_and_stats(xp_flat, w_toe, H, W, Ctot)

    # BatchNorm batch statistics per final channel (biased variance).
    s_tot = s.sum(axis=0).reshape(2, W, 4, 2 * Cp).sum(axis=(1, 2))   # (2, 2Cp)
    count = N * H * W * 4                                             # = N*2H*2W
    mean = s_tot[0] / count
    var = s_tot[1] / count - mean * mean
    scale = gamma / jnp.sqrt(var + eps)
    bias = beta - mean * scale
    scale_row = jnp.tile(scale, 4 * W).reshape(1, W * Ctot)
    bias_row = jnp.tile(bias, 4 * W).reshape(1, W * Ctot)

    # Kernel 2: fused BN affine + ReLU (lane-dense elementwise pass).
    z = bn_relu(y.reshape(N * H, W * Ctot), scale_row, bias_row)

    # PixelShuffle + concat + NCHW: one final transpose (the channel permutation
    # was already folded into the conv-weight ordering).
    z = z.reshape(N, H, W, 2, 2, 2 * Cp)             # (n, h, w, i, j, c)
    out = jnp.transpose(z, (0, 5, 1, 3, 2, 4))       # (n, c, h, i, w, j)
    return out.reshape(N, 2 * Cp, 2 * H, 2 * W).astype(x_nchw.dtype)


# ---------------------------------------------------------------------------
# Pure-JAX reference (mirrors the PyTorch module) for a sanity check.
# ---------------------------------------------------------------------------
def _reference(x_nchw, w3_hwio, w5_hwio, gamma, beta, eps=1e-5):
    N, Cin, H, W = x_nchw.shape
    x_nhwc = jnp.transpose(x_nchw, (0, 2, 3, 1)).astype(jnp.float32)

    def conv(xn, w, pad):
        xpad = jnp.pad(xn, ((0, 0), (pad, pad), (pad, pad), (0, 0)),
                       mode="reflect")
        return jax.lax.conv_general_dilated(
            xpad, w, window_strides=(1, 1), padding="VALID",
            dimension_numbers=("NHWC", "HWIO", "NHWC"))

    def pixel_shuffle(y_nhwc):                       # -> NCHW upsampled
        y = jnp.transpose(y_nhwc, (0, 3, 1, 2))      # (N, 4Cp, H, W)
        Cq = y.shape[1] // 4
        y = y.reshape(N, Cq, 2, 2, H, W)
        y = jnp.transpose(y, (0, 1, 4, 2, 5, 3))
        return y.reshape(N, Cq, 2 * H, 2 * W)

    y = jnp.concatenate([pixel_shuffle(conv(x_nhwc, w3_hwio, 1)),
                         pixel_shuffle(conv(x_nhwc, w5_hwio, 2))], axis=1)
    mean = y.mean(axis=(0, 2, 3), keepdims=True)
    var = y.var(axis=(0, 2, 3), keepdims=True)       # biased
    y = (y - mean) / jnp.sqrt(var + eps)
    y = y * gamma.reshape(1, -1, 1, 1) + beta.reshape(1, -1, 1, 1)
    return jnp.maximum(y, 0.0)


if __name__ == "__main__":
    key = jax.random.PRNGKey(0)
    k_x, k_w3, k_w5, k_g, k_b = jax.random.split(key, 5)

    N, Cin, H, W = 2, 4, 16, 16
    Cout = 8                       # module out_channels
    Cp = Cout // 2                 # out_channels_per_conv

    x = jax.random.normal(k_x, (N, Cin, H, W), jnp.float32)
    # conv weights kept in HWIO (the PyTorch module stores OIHW; same values)
    w3 = 0.10 * jax.random.normal(k_w3, (3, 3, Cin, 4 * Cp), jnp.float32)
    w5 = 0.05 * jax.random.normal(k_w5, (5, 5, Cin, 4 * Cp), jnp.float32)
    gamma = 1.0 + 0.1 * jax.random.normal(k_g, (Cout,), jnp.float32)
    beta = 0.1 * jax.random.normal(k_b, (Cout,), jnp.float32)

    out = variable_filter_size_up_block(x, w3, w5, gamma, beta)
    jax.block_until_ready(out)
    assert out.shape == (N, Cout, 2 * H, 2 * W)

    ref = _reference(x, w3, w5, gamma, beta)
    err = float(jnp.max(jnp.abs(out - ref)))
    assert err < 0.1, f"max abs error vs reference too large: {err}"
    print("KERNEL_OK")
</pallas_src>

<mosaic_0001>
module attributes {stable_mosaic.version = 11 : i64} {
  func.func @_conv_stats_kernel(%arg0: i32, %arg1: i32, %arg2: memref<1x20x80xf32, #tpu.memory_space<vmem>>, %arg3: memref<5x80x512xbf16, #tpu.memory_space<vmem>>, %arg4: memref<1x8x512xf32, #tpu.memory_space<vmem>>, %arg5: memref<1x2x512xf32, #tpu.memory_space<vmem>>) attributes {dimension_semantics = [#tpu.dimension_semantics<parallel>, #tpu.dimension_semantics<arbitrary>], iteration_bounds = array<i64: 2, 2>, scalar_prefetch = 0 : i64, scratch_operands = 0 : i64, tpu.core_type = #tpu.core_type<tc>, window_params = [{transform_indices = @transform_0, window_bounds = array<i64: 1, 20, 80>}, {pipeline_mode = #tpu.pipeline_mode<synchronous>, transform_indices = @transform_1, window_bounds = array<i64: 5, 80, 512>}, {transform_indices = @transform_2, window_bounds = array<i64: 1, 8, 512>}, {transform_indices = @transform_3, window_bounds = array<i64: 1, 2, 512>}]} {
    %c0_i32 = arith.constant 0 : i32
    %0 = arith.cmpi eq, %arg1, %c0_i32 : i32
    %1 = arith.extui %0 : i1 to i32
    %c0_i32_0 = arith.constant 0 : i32
    %2 = arith.cmpi ne, %1, %c0_i32_0 : i32
    scf.if %2 {
      %cst_44 = arith.constant 0.000000e+00 : f32
      %71 = vector.broadcast %cst_44 : f32 to vector<1x2x512xf32>
      %c0_45 = arith.constant 0 : index
      %c0_46 = arith.constant 0 : index
      %c0_47 = arith.constant 0 : index
      %72 = vector.load %arg5[%c0_45, %c0_46, %c0_47] : memref<1x2x512xf32, #tpu.memory_space<vmem>>, vector<1x2x512xf32>
      tpu.vector_store %arg5[%c0_45, %c0_46, %c0_47], %71 {strides = array<i32>} : memref<1x2x512xf32, #tpu.memory_space<vmem>>, vector<1x2x512xf32>,
    } else {
    }
    %c8_i32 = arith.constant 8 : i32
    %3 = arith.muli %arg1, %c8_i32 : i32
    %4 = tpu.assume_multiple %3, 8 : i32
    %cst = arith.constant 0.000000e+00 : f32
    %5 = vector.broadcast %cst : f32 to vector<8x512xf32>
    %c0_i32_1 = arith.constant 0 : i32
    %6 = arith.addi %4, %c0_i32_1 : i32
    %c0 = arith.constant 0 : index
    %7 = arith.index_cast %6 : i32 to index
    %c0_2 = arith.constant 0 : index
    %8 = vector.load %arg2[%c0, %7, %c0_2] : memref<1x20x80xf32, #tpu.memory_space<vmem>>, vector<1x8x80xf32>
    %9 = vector.shape_cast %8 : vector<1x8x80xf32> to vector<8x80xf32>
    %10 = arith.truncf %9 : vector<8x80xf32> to vector<8x80xbf16>
    %c0_3 = arith.constant 0 : index
    %c0_4 = arith.constant 0 : index
    %c0_5 = arith.constant 0 : index
    %11 = vector.load %arg3[%c0_3, %c0_4, %c0_5] : memref<5x80x512xbf16, #tpu.memory_space<vmem>>, vector<1x80x512xbf16>
    %12 = vector.shape_cast %11 : vector<1x80x512xbf16> to vector<80x512xbf16>
    %cst_6 = arith.constant dense<0.000000e+00> : vector<8x512xf32>
    %13 = tpu.matmul %10, %12, %cst_6 {dimension_numbers = #tpu.dot_dimension_numbers<[1], [0], [0], [1], [0, 0, 1, 1], [], []>} : vector<8x80xbf16>, vector<80x512xbf16>, vector<8x512xf32> -> vector<8x512xf32>
    %14 = arith.addf %5, %13 : vector<8x512xf32>
    %c1_i32 = arith.constant 1 : i32
    %15 = arith.addi %4, %c1_i32 : i32
    %c0_7 = arith.constant 0 : index
    %16 = arith.index_cast %15 : i32 to index
    %c0_8 = arith.constant 0 : index
    %17 = vector.load %arg2[%c0_7, %16, %c0_8] : memref<1x20x80xf32, #tpu.memory_space<vmem>>, vector<1x8x80xf32>
    %18 = vector.shape_cast %17 : vector<1x8x80xf32> to vector<8x80xf32>
    %19 = arith.truncf %18 : vector<8x80xf32> to vector<8x80xbf16>
    %c1 = arith.constant 1 : index
    %c0_9 = arith.constant 0 : index
    %c0_10 = arith.constant 0 : index
    %20 = vector.load %arg3[%c1, %c0_9, %c0_10] : memref<5x80x512xbf16, #tpu.memory_space<vmem>>, vector<1x80x512xbf16>
    %21 = vector.shape_cast %20 : vector<1x80x512xbf16> to vector<80x512xbf16>
    %cst_11 = arith.constant dense<0.000000e+00> : vector<8x512xf32>
    %22 = tpu.matmul %19, %21, %cst_11 {dimension_numbers = #tpu.dot_dimension_numbers<[1], [0], [0], [1], [0, 0, 1, 1], [], []>} : vector<8x80xbf16>, vector<80x512xbf16>, vector<8x512xf32> -> vector<8x512xf32>
    %23 = arith.addf %14, %22 : vector<8x512xf32>
    %c2_i32 = arith.constant 2 : i32
    %24 = arith.addi %4, %c2_i32 : i32
    %c0_12 = arith.constant 0 : index
    %25 = arith.index_cast %24 : i32 to index
    %c0_13 = arith.constant 0 : index
    %26 = vector.load %arg2[%c0_12, %25, %c0_13] : memref<1x20x80xf32, #tpu.memory_space<vmem>>, vector<1x8x80xf32>
    %27 = vector.shape_cast %26 : vector<1x8x80xf32> to vector<8x80xf32>
    %28 = arith.truncf %27 : vector<8x80xf32> to vector<8x80xbf16>
    %c2 = arith.constant 2 : index
    %c0_14 = arith.constant 0 : index
    %c0_15 = arith.constant 0 : index
    %29 = vector.load %arg3[%c2, %c0_14, %c0_15] : memref<5x80x512xbf16, #tpu.memory_space<vmem>>, vector<1x80x512xbf16>
    %30 = vector.shape_cast %29 : vector<1x80x512xbf16> to vector<80x512xbf16>
    %cst_16 = arith.constant dense<0.000000e+00> : vector<8x512xf32>
    %31 = tpu.matmul %28, %30, %cst_16 {dimension_numbers = #tpu.dot_dimension_numbers<[1], [0], [0], [1], [0, 0, 1, 1], [], []>} : vector<8x80xbf16>, vector<80x512xbf16>, vector<8x512xf32> -> vector<8x512xf32>
    %32 = arith.addf %23, %31 : vector<8x512xf32>
    %c3_i32 = arith.constant 3 : i32
    %33 = arith.addi %4, %c3_i32 : i32
    %c0_17 = arith.constant 0 : index
    %34 = arith.index_cast %33 : i32 to index
    %c0_18 = arith.constant 0 : index
    %35 = vector.load %arg2[%c0_17, %34, %c0_18] : memref<1x20x80xf32, #tpu.memory_space<vmem>>, vector<1x8x80xf32>
    %36 = vector.shape_cast %35 : vector<1x8x80xf32> to vector<8x80xf32>
    %37 = arith.truncf %36 : vector<8x80xf32> to vector<8x80xbf16>
    %c3 = arith.constant 3 : index
    %c0_19 = arith.constant 0 : index
    %c0_20 = arith.constant 0 : index
    %38 = vector.load %arg3[%c3, %c0_19, %c0_20] : memref<5x80x512xbf16, #tpu.memory_space<vmem>>, vector<1x80x512xbf16>
    %39 = vector.shape_cast %38 : vector<1x80x512xbf16> to vector<80x512xbf16>
    %cst_21 = arith.constant dense<0.000000e+00> : vector<8x512xf32>
    %40 = tpu.matmul %37, %39, %cst_21 {dimension_numbers = #tpu.dot_dimension_numbers<[1], [0], [0], [1], [0, 0, 1, 1], [], []>} : vector<8x80xbf16>, vector<80x512xbf16>, vector<8x512xf32> -> vector<8x512xf32>
    %41 = arith.addf %32, %40 : vector<8x512xf32>
    %c4_i32 = arith.constant 4 : i32
    %42 = arith.addi %4, %c4_i32 : i32
    %c0_22 = arith.constant 0 : index
    %43 = arith.index_cast %42 : i32 to index
    %c0_23 = arith.constant 0 : index
    %44 = vector.load %arg2[%c0_22, %43, %c0_23] : memref<1x20x80xf32, #tpu.memory_space<vmem>>, vector<1x8x80xf32>
    %45 = vector.shape_cast %44 : vector<1x8x80xf32> to vector<8x80xf32>
    %46 = arith.truncf %45 : vector<8x80xf32> to vector<8x80xbf16>
    %c4 = arith.constant 4 : index
    %c0_24 = arith.constant 0 : index
    %c0_25 = arith.constant 0 : index
    %47 = vector.load %arg3[%c4, %c0_24, %c0_25] : memref<5x80x512xbf16, #tpu.memory_space<vmem>>, vector<1x80x512xbf16>
    %48 = vector.shape_cast %47 : vector<1x80x512xbf16> to vector<80x512xbf16>
    %cst_26 = arith.constant dense<0.000000e+00> : vector<8x512xf32>
    %49 = tpu.matmul %46, %48, %cst_26 {dimension_numbers = #tpu.dot_dimension_numbers<[1], [0], [0], [1], [0, 0, 1, 1], [], []>} : vector<8x80xbf16>, vector<80x512xbf16>, vector<8x512xf32> -> vector<8x512xf32>
    %50 = arith.addf %41, %49 : vector<8x512xf32>
    %c0_27 = arith.constant 0 : index
    %c0_28 = arith.constant 0 : index
    %c0_29 = arith.constant 0 : index
    %51 = vector.load %arg4[%c0_27, %c0_28, %c0_29] : memref<1x8x512xf32, #tpu.memory_space<vmem>>, vector<1x8x512xf32>
    %52 = vector.shape_cast %51 : vector<1x8x512xf32> to vector<8x512xf32>
    %53 = vector.shape_cast %50 : vector<8x512xf32> to vector<1x8x512xf32>
    tpu.vector_store %arg4[%c0_27, %c0_28, %c0_29], %53 {strides = array<i32>} : memref<1x8x512xf32, #tpu.memory_space<vmem>>, vector<1x8x512xf32>,
    %c0_30 = arith.constant 0 : index
    %c0_31 = arith.constant 0 : index
    %c0_32 = arith.constant 0 : index
    %54 = vector.load %arg5[%c0_30, %c0_31, %c0_32] : memref<1x2x512xf32, #tpu.memory_space<vmem>>, vector<1x1x512xf32>
    %55 = vector.shape_cast %54 : vector<1x1x512xf32> to vector<1x512xf32>
    %cst_33 = arith.constant dense<0.000000e+00> : vector<512xf32>
    %56 = vector.multi_reduction <add>, %50, %cst_33 [0] : vector<8x512xf32> to vector<512xf32>
    %57 = vector.shape_cast %56 : vector<512xf32> to vector<1x512xf32>
    %58 = arith.addf %55, %57 : vector<1x512xf32>
    %c0_34 = arith.constant 0 : index
    %c0_35 = arith.constant 0 : index
    %c0_36 = arith.constant 0 : index
    %59 = vector.load %arg5[%c0_34, %c0_35, %c0_36] : memref<1x2x512xf32, #tpu.memory_space<vmem>>, vector<1x1x512xf32>
    %60 = vector.shape_cast %59 : vector<1x1x512xf32> to vector<1x512xf32>
    %61 = vector.shape_cast %58 : vector<1x512xf32> to vector<1x1x512xf32>
    tpu.vector_store %arg5[%c0_34, %c0_35, %c0_36], %61 {strides = array<i32>} : memref<1x2x512xf32, #tpu.memory_space<vmem>>, vector<1x1x512xf32>,
    %c0_37 = arith.constant 0 : index
    %c1_38 = arith.constant 1 : index
    %c0_39 = arith.constant 0 : index
    %62 = vector.load %arg5[%c0_37, %c1_38, %c0_39] : memref<1x2x512xf32, #tpu.memory_space<vmem>>, vector<1x1x512xf32>
    %63 = vector.shape_cast %62 : vector<1x1x512xf32> to vector<1x512xf32>
    %64 = arith.mulf %50, %50 : vector<8x512xf32>
    %cst_40 = arith.constant dense<0.000000e+00> : vector<512xf32>
    %65 = vector.multi_reduction <add>, %64, %cst_40 [0] : vector<8x512xf32> to vector<512xf32>
    %66 = vector.shape_cast %65 : vector<512xf32> to vector<1x512xf32>
    %67 = arith.addf %63, %66 : vector<1x512xf32>
    %c0_41 = arith.constant 0 : index
    %c1_42 = arith.constant 1 : index
    %c0_43 = arith.constant 0 : index
    %68 = vector.load %arg5[%c0_41, %c1_42, %c0_43] : memref<1x2x512xf32, #tpu.memory_space<vmem>>, vector<1x1x512xf32>
    %69 = vector.shape_cast %68 : vector<1x1x512xf32> to vector<1x512xf32>
    %70 = vector.shape_cast %67 : vector<1x512xf32> to vector<1x1x512xf32>
    tpu.vector_store %arg5[%c0_41, %c1_42, %c0_43], %70 {strides = array<i32>} : memref<1x2x512xf32, #tpu.memory_space<vmem>>, vector<1x1x512xf32>,
    return
  }
  func.func @transform_0(%arg0: i32, %arg1: i32) -> (i32, i32, i32) {
    %c0_i32 = arith.constant 0 : i32
    %c0_i32_0 = arith.constant 0 : i32
    %c0_i32_1 = arith.constant 0 : i32
    return %arg0, %c0_i32, %c0_i32_0 : i32, i32, i32
  }
  func.func @transform_1(%arg0: i32, %arg1: i32) -> (i32, i32, i32) {
    %c0_i32 = arith.constant 0 : i32
    %c0_i32_0 = arith.constant 0 : i32
    %c0_i32_1 = arith.constant 0 : i32
    %c0_i32_2 = arith.constant 0 : i32
    return %c0_i32, %c0_i32_0, %c0_i32_1 : i32, i32, i32
  }
  func.func @transform_2(%arg0: i32, %arg1: i32) -> (i32, i32, i32) {
    %c0_i32 = arith.constant 0 : i32
    %c0_i32_0 = arith.constant 0 : i32
    return %arg0, %arg1, %c0_i32 : i32, i32, i32
  }
  func.func @transform_3(%arg0: i32, %arg1: i32) -> (i32, i32, i32) {
    %c0_i32 = arith.constant 0 : i32
    %c0_i32_0 = arith.constant 0 : i32
    %c0_i32_1 = arith.constant 0 : i32
    return %arg0, %c0_i32, %c0_i32_0 : i32, i32, i32
  }
}

module attributes {stable_mosaic.version = 11 : i64} {
  func.func @_bn_relu_kernel(%arg0: i32, %arg1: memref<8x512xf32, #tpu.memory_space<vmem>>, %arg2: memref<1x512xf32, #tpu.memory_space<vmem>>, %arg3: memref<1x512xf32, #tpu.memory_space<vmem>>, %arg4: memref<8x512xf32, #tpu.memory_space<vmem>>) attributes {dimension_semantics = [#tpu.dimension_semantics<parallel>], iteration_bounds = array<i64: 4>, scalar_prefetch = 0 : i64, scratch_operands = 0 : i64, tpu.core_type = #tpu.core_type<tc>, window_params = [{transform_indices = @transform_0, window_bounds = array<i64: 8, 512>}, {pipeline_mode = #tpu.pipeline_mode<synchronous>, transform_indices = @transform_1, window_bounds = array<i64: 1, 512>}, {pipeline_mode = #tpu.pipeline_mode<synchronous>, transform_indices = @transform_2, window_bounds = array<i64: 1, 512>}, {transform_indices = @transform_3, window_bounds = array<i64: 8, 512>}]} {
    %c0 = arith.constant 0 : index
    %c0_0 = arith.constant 0 : index
    %0 = vector.load %arg1[%c0, %c0_0] : memref<8x512xf32, #tpu.memory_space<vmem>>, vector<8x512xf32>
    %c0_1 = arith.constant 0 : index
    %c0_2 = arith.constant 0 : index
    %1 = vector.load %arg2[%c0_1, %c0_2] : memref<1x512xf32, #tpu.memory_space<vmem>>, vector<1x512xf32>
    %2 = vector.broadcast %1 : vector<1x512xf32> to vector<8x512xf32>
    %3 = arith.mulf %0, %2 : vector<8x512xf32>
    %c0_3 = arith.constant 0 : index
    %c0_4 = arith.constant 0 : index
    %4 = vector.load %arg3[%c0_3, %c0_4] : memref<1x512xf32, #tpu.memory_space<vmem>>, vector<1x512xf32>
    %5 = vector.broadcast %4 : vector<1x512xf32> to vector<8x512xf32>
    %6 = arith.addf %3, %5 : vector<8x512xf32>
    %cst = arith.constant 0.000000e+00 : f32
    %7 = vector.broadcast %cst : f32 to vector<8x512xf32>
    %8 = arith.maximumf %6, %7 : vector<8x512xf32>
    %c0_5 = arith.constant 0 : index
    %c0_6 = arith.constant 0 : index
    %9 = vector.load %arg4[%c0_5, %c0_6] : memref<8x512xf32, #tpu.memory_space<vmem>>, vector<8x512xf32>
    tpu.vector_store %arg4[%c0_5, %c0_6], %8 {strides = array<i32>} : memref<8x512xf32, #tpu.memory_space<vmem>>, vector<8x512xf32>,
    return
  }
  func.func @transform_0(%arg0: i32) -> (i32, i32) {
    %c0_i32 = arith.constant 0 : i32
    %c0_i32_0 = arith.constant 0 : i32
    return %arg0, %c0_i32 : i32, i32
  }
  func.func @transform_1(%arg0: i32) -> (i32, i32) {
    %c0_i32 = arith.constant 0 : i32
    %c0_i32_0 = arith.constant 0 : i32
    %c0_i32_1 = arith.constant 0 : i32
    return %c0_i32, %c0_i32_0 : i32, i32
  }
  func.func @transform_2(%arg0: i32) -> (i32, i32) {
    %c0_i32 = arith.constant 0 : i32
    %c0_i32_0 = arith.constant 0 : i32
    %c0_i32_1 = arith.constant 0 : i32
    return %c0_i32, %c0_i32_0 : i32, i32
  }
  func.func @transform_3(%arg0: i32) -> (i32, i32) {
    %c0_i32 = arith.constant 0 : i32
    %c0_i32_0 = arith.constant 0 : i32
    return %arg0, %c0_i32 : i32, i32
  }
}

</mosaic_0001>

<llo_original>
// kernel: tile.18
$region0: #{tile.18}
  #allocation0 [shape = 's32[1]{0}', space=sflag, size = 0x4, scoped, tag = 'scoped memory for tile.18']
  %s0 = inlined_call_operand.vmem [shape: f32[8], index: 0, kind: input, shape index: {}]
  %s1 = inlined_call_operand.vmem [shape: f32[64,8], index: 1, kind: output, shape index: {}]
  // Predicated region
  $region2: #{tile.18} parent=0 // pred_check
    _
  $region3: #{tile.18} parent=0 // pred_check_branch
    %3 = sbr.rel (0) target = $region5
  $region4: #{tile.18} parent=0 // pred_region
    _
  $region5: #{tile.18} parent=0 // pred_fallthru
    _
  %v4 = vld [vmem:[%s0] ss:$0 sm:$0xff]
  %5 = vst [vmem:[%s1] sm:$0xff] %v4
  %s6 = scalar_lea.vmem %s1, 8
  %7 = vst [vmem:[%s6] sm:$0xff] %v4
  %s8 = scalar_lea.vmem %s1, 16
  %9 = vst [vmem:[%s8] sm:$0xff] %v4
  %s10 = scalar_lea.vmem %s1, 24
  %11 = vst [vmem:[%s10] sm:$0xff] %v4
  %s12 = scalar_lea.vmem %s1, 32
  %13 = vst [vmem:[%s12] sm:$0xff] %v4
  %s14 = scalar_lea.vmem %s1, 40
  %15 = vst [vmem:[%s14] sm:$0xff] %v4
  %s16 = scalar_lea.vmem %s1, 48
  %17 = vst [vmem:[%s16] sm:$0xff] %v4
  %s18 = scalar_lea.vmem %s1, 56
  %19 = vst [vmem:[%s18] sm:$0xff] %v4

// kernel: tile.19
$region0: #{tile.19}
  %s0 = inlined_call_operand.vmem [shape: f32[64,8], index: 0, kind: input, shape index: {}]
  %s1 = inlined_call_operand.vmem [shape: f32[1,512], index: 1, kind: output, shape index: {}]
  $region1: #{tile.19} parent=0
    #allocation0 [shape = 'u8[16384]{0}', space=vmem, size = 0x4000, scoped, tag = 'scoped mem for output reshape']
    %s2 = smov 3
    %v3 = vld [vmem:[%s0] ss:$16 sm:%s2]
    %s4 = smov 12
    %v5 = vld [vmem:[%s0] ss:$16 sm:%s4]
    %vm6 = vcmask 1043458
    %v7 = vsel %vm6, %v5, %v3
    %vm8 = vcmask 64512
    %9 = vst.msk [vmem:[#allocation0] ss:$8 sm:$0xf] %vm8, %v7
    %s10 = scalar_lea.vmem %s0, 15
    %s11 = smov 3
    %v12 = vld [vmem:[%s10] ss:$16 sm:%s11]
    %s13 = scalar_lea.vmem %s0, 15
    %s14 = smov 12
    %v15 = vld [vmem:[%s13] ss:$16 sm:%s14]
    %vm16 = vcmask 1043458
    %v17 = vsel %vm16, %v15, %v12
    %18 = vrot.lane.b32.xlu0 %v17, 120
    %v19 = vpop.permute.xlu0 %18
    %vm20 = vcmask 1048512
    %21 = vst.msk [vmem:[#allocation0] ss:$8 sm:$0xf] %vm20, %v19
    %s22 = scalar_lea.vmem %s0, 14
    %s23 = smov 3
    %v24 = vld [vmem:[%s22] ss:$16 sm:%s23]
    %s25 = scalar_lea.vmem %s0, 14
    %s26 = smov 12
    %v27 = vld [vmem:[%s25] ss:$16 sm:%s26]
    %vm28 = vcmask 1043458
    %v29 = vsel %vm28, %v27, %v24
    %30 = vrot.lane.b32.xlu0 %v29, 112
    %v31 = vpop.permute.xlu0 %30
    %vm32 = vcmask 982912
    %33 = vst.msk [vmem:[#allocation0] ss:$8 sm:$0xf] %vm32, %v31
    %s34 = scalar_lea.vmem %s0, 13
    %s35 = smov 3
    %v36 = vld [vmem:[%s34] ss:$16 sm:%s35]
    %s37 = scalar_lea.vmem %s0, 13
    %s38 = smov 12
    %v39 = vld [vmem:[%s37] ss:$16 sm:%s38]
    %vm40 = vcmask 1043458
    %v41 = vsel %vm40, %v39, %v36
    %42 = vrot.lane.b32.xlu0 %v41, 104
    %v43 = vpop.permute.xlu0 %42
    %vm44 = vcmask 917312
    %45 = vst.msk [vmem:[#allocation0] ss:$8 sm:$0xf] %vm44, %v43
    %s46 = scalar_lea.vmem %s0, 12
    %s47 = smov 3
    %v48 = vld [vmem:[%s46] ss:$16 sm:%s47]
    %s49 = scalar_lea.vmem %s0, 12
    %s50 = smov 12
    %v51 = vld [vmem:[%s49] ss:$16 sm:%s50]
    %vm52 = vcmask 1043458
    %v53 = vsel %vm52, %v51, %v48
    %54 = vrot.lane.b32.xlu0 %v53, 96
    %v55 = vpop.permute.xlu0 %54
    %vm56 = vcmask 851712
    %57 = vst.msk [vmem:[#allocation0] ss:$8 sm:$0xf] %vm56, %v55
    %s58 = scalar_lea.vmem %s0, 11
    %s59 = smov 3
    %v60 = vld [vmem:[%s58] ss:$16 sm:%s59]
    %s61 = scalar_lea.vmem %s0, 11
    %s62 = smov 12
    %v63 = vld [vmem:[%s61] ss:$16 sm:%s62]
    %vm64 = vcmask 1043458
    %v65 = vsel %vm64, %v63, %v60
    %66 = vrot.lane.b32.xlu0 %v65, 88
    %v67 = vpop.permute.xlu0 %66
    %vm68 = vcmask 786112
    %69 = vst.msk [vmem:[#allocation0] ss:$8 sm:$0xf] %vm68, %v67
    %s70 = scalar_lea.vmem %s0, 10
    %s71 = smov 3
    %v72 = vld [vmem:[%s70] ss:$16 sm:%s71]
    %s73 = scalar_lea.vmem %s0, 10
    %s74 = smov 12
    %v75 = vld [vmem:[%s73] ss:$16 sm:%s74]
    %vm76 = vcmask 1043458
    %v77 = vsel %vm76, %v75, %v72
    %78 = vrot.lane.b32.xlu0 %v77, 80
    %v79 = vpop.permute.xlu0 %78
    %vm80 = vcmask 720512
    %81 = vst.msk [vmem:[#allocation0] ss:$8 sm:$0xf] %vm80, %v79
    %s82 = scalar_lea.vmem %s0, 9
    %s83 = smov 3
    %v84 = vld [vmem:[%s82] ss:$16 sm:%s83]
    %s85 = scalar_lea.vmem %s0, 9
    %s86 = smov 12
    %v87 = vld [vmem:[%s85] ss:$16 sm:%s86]
    %vm88 = vcmask 1043458
    %v89 = vsel %vm88, %v87, %v84
    %90 = vrot.lane.b32.xlu0 %v89, 72
    %v91 = vpop.permute.xlu0 %90
    %vm92 = vcmask 654912
    %93 = vst.msk [vmem:[#allocation0] ss:$8 sm:$0xf] %vm92, %v91
    %s94 = scalar_lea.vmem %s0, 8
    %s95 = smov 3
    %v96 = vld [vmem:[%s94] ss:$16 sm:%s95]
    %s97 = scalar_lea.vmem %s0, 8
    %s98 = smov 12
    %v99 = vld [vmem:[%s97] ss:$16 sm:%s98]
    %vm100 = vcmask 1043458
    %v101 = vsel %vm100, %v99, %v96
    %102 = vrot.lane.b32.xlu0 %v101, 64
    %v103 = vpop.permute.xlu0 %102
    %vm104 = vcmask 589312
    %105 = vst.msk [vmem:[#allocation0] ss:$8 sm:$0xf] %vm104, %v103
    %s106 = scalar_lea.vmem %s0, 7
    %s107 = smov 3
    %v108 = vld [vmem:[%s106] ss:$16 sm:%s107]
    %s109 = scalar_lea.vmem %s0, 7
    %s110 = smov 12
    %v111 = vld [vmem:[%s109] ss:$16 sm:%s110]
    %vm112 = vcmask 1043458
    %v113 = vsel %vm112, %v111, %v108
    %114 = vrot.lane.b32.xlu0 %v113, 56
    %v115 = vpop.permute.xlu0 %114
    %vm116 = vcmask 523712
    %117 = vst.msk [vmem:[#allocation0] ss:$8 sm:$0xf] %vm116, %v115
    %s118 = scalar_lea.vmem %s0, 6
    %s119 = smov 3
    %v120 = vld [vmem:[%s118] ss:$16 sm:%s119]
    %s121 = scalar_lea.vmem %s0, 6
    %s122 = smov 12
    %v123 = vld [vmem:[%s121] ss:$16 sm:%s122]
    %vm124 = vcmask 1043458
    %v125 = vsel %vm124, %v123, %v120
    %126 = vrot.lane.b32.xlu0 %v125, 48
    %v127 = vpop.permute.xlu0 %126
    %vm128 = vcmask 458112
    %129 = vst.msk [vmem:[#allocation0] ss:$8 sm:$0xf] %vm128, %v127
    %s130 = scalar_lea.vmem %s0, 5
    %s131 = smov 3
    %v132 = vld [vmem:[%s130] ss:$16 sm:%s131]
    %s133 = scalar_lea.vmem %s0, 5
    %s134 = smov 12
    %v135 = vld [vmem:[%s133] ss:$16 sm:%s134]
    %vm136 = vcmask 1043458
    %v137 = vsel %vm136, %v135, %v132
    %138 = vrot.lane.b32.xlu0 %v137, 40
    %v139 = vpop.permute.xlu0 %138
    %vm140 = vcmask 392512
    %141 = vst.msk [vmem:[#allocation0] ss:$8 sm:$0xf] %vm140, %v139
    %s142 = scalar_lea.vmem %s0, 4
    %s143 = smov 3
    %v144 = vld [vmem:[%s142] ss:$16 sm:%s143]
    %s145 = scalar_lea.vmem %s0, 4
    %s146 = smov 12
    %v147 = vld [vmem:[%s145] ss:$16 sm:%s146]
    %vm148 = vcmask 1043458
    %v149 = vsel %vm148, %v147, %v144
    %150 = vrot.lane.b32.xlu0 %v149, 32
    %v151 = vpop.permute.xlu0 %150
    %vm152 = vcmask 326912
    %153 = vst.msk [vmem:[#allocation0] ss:$8 sm:$0xf] %vm152, %v151
    %s154 = scalar_lea.vmem %s0, 3
    %s155 = smov 3
    %v156 = vld [vmem:[%s154] ss:$16 sm:%s155]
    %s157 = scalar_lea.vmem %s0, 3
    %s158 = smov 12
    %v159 = vld [vmem:[%s157] ss:$16 sm:%s158]
    %vm160 = vcmask 1043458
    %v161 = vsel %vm160, %v159, %v156
    %162 = vrot.lane.b32.xlu0 %v161, 24
    %v163 = vpop.permute.xlu0 %162
    %vm164 = vcmask 261312
    %165 = vst.msk [vmem:[#allocation0] ss:$8 sm:$0xf] %vm164, %v163
    %s166 = scalar_lea.vmem %s0, 2
    %s167 = smov 3
    %v168 = vld [vmem:[%s166] ss:$16 sm:%s167]
    %s169 = scalar_lea.vmem %s0, 2
    %s170 = smov 12
    %v171 = vld [vmem:[%s169] ss:$16 sm:%s170]
    %vm172 = vcmask 1043458
    %v173 = vsel %vm172, %v171, %v168
    %174 = vrot.lane.b32.xlu0 %v173, 16
    %v175 = vpop.permute.xlu0 %174
    %vm176 = vcmask 195712
    %177 = vst.msk [vmem:[#allocation0] ss:$8 sm:$0xf] %vm176, %v175
    %s178 = scalar_lea.vmem %s0, 1
    %s179 = smov 3
    %v180 = vld [vmem:[%s178] ss:$16 sm:%s179]
    %s181 = scalar_lea.vmem %s0, 1
    %s182 = smov 12
    %v183 = vld [vmem:[%s181] ss:$16 sm:%s182]
    %vm184 = vcmask 1043458
    %v185 = vsel %vm184, %v183, %v180
    %186 = vrot.lane.b32.xlu0 %v185, 8
    %v187 = vpop.permute.xlu0 %186
    %vm188 = vcmask 130112
    %189 = vst.msk [vmem:[#allocation0] ss:$8 sm:$0xf] %vm188, %v187
    %s191 = sshllo.u32 0, 1
    %v193 = vld [vmem:[#allocation0] sm:%s191]
    %s194 = sshllo.u32 0, 1
    %195 = vst [vmem:[%s1] sm:%s194] %v193
    %s196 = scalar_lea.vmem [#allocation0], 8
    %v197 = vld [vmem:[%s196] sm:%s191]
    %s198 = sshllo.u32 0, 1
    %s199 = scalar_lea.vmem %s1, 1
    %200 = vst [vmem:[%s199] sm:%s198] %v197
    %s201 = scalar_lea.vmem [#allocation0], 16
    %v202 = vld [vmem:[%s201] sm:%s191]
    %s203 = sshllo.u32 0, 1
    %s204 = smul.addr 1, 2
    %s205 = scalar_lea.vmem %s1, %s204
    %206 = vst [vmem:[%s205] sm:%s203] %v202
    %s207 = scalar_lea.vmem [#allocation0], 24
    %v208 = vld [vmem:[%s207] sm:%s191]
    %s209 = sshllo.u32 0, 1
    %s210 = smul.addr 1, 3
    %s211 = scalar_lea.vmem %s1, %s210
    %212 = vst [vmem:[%s211] sm:%s209] %v208

// kernel: variable_filter_size_up_block.3
$region0: #{variable_filter_size_up_block.3}
  #allocation0 [shape = 'u32[]', space=smem, size = 0x4, offset = 0x4, fixed_abs, tag = 'smem constant byte address 0x4 - core index']
  #allocation1 [shape = 'u32[144,128]{1,0:T(1,128)}', space=vmem, size = 0x12000, scoped, tag = 'internal scratch']
  %s0 = inlined_call_operand.vmem [shape: f32[32,512], index: 0, kind: input, shape index: {}]
  %s1 = inlined_call_operand.vmem [shape: f32[1,512], index: 1, kind: input, shape index: {}]
  %s2 = inlined_call_operand.vmem [shape: f32[1,512], index: 2, kind: input, shape index: {}]
  %s3 = inlined_call_operand.vmem [shape: f32[32,512], index: 3, kind: output, shape index: {}]
  %s4 = sld [smem:[#allocation0]]
  $region45: #{variable_filter_size_up_block.3} parent=0
    _
  %s6 = ssub.s32 1, %s4
  %s7 = scalar_select 0, %s6, %s4
  loop: start=0, step=1, limit=6
  $region2: #{variable_filter_size_up_block.3} parent=0 // loop_pre_header
    _
  $region3: #{variable_filter_size_up_block.3} parent=0 // loop_header
    %s9 = sphi 0, %s13
    %p10 = scmp.ge.s32.totalorder %s9, 6
    %s19 = sphi 0, %s21
    %s22 = sphi 0, %s19
    %s23 = sphi 0, %s22
    %s39 = sphi 0, %s23
    %s43 = sphi 0, %s43
    %s45 = sphi 0, %s43
    %s46 = sphi 0, %s45
    %s60 = sphi 0, %s46
    %s64 = sphi 0, %s64
    %s66 = sphi 0, %s64
    %s67 = sphi 0, %s66
    %s81 = sphi 0, %s67
    %s87 = sphi 0, %s89
    %s90 = sphi 0, %s87
    %s91 = sphi 0, %s90
    %s107 = sphi 0, %s91
  $region4: #{variable_filter_size_up_block.3} parent=0 // loop_header_branch
    %12 = sbr.rel (%p10) target = $region8
  $region5: #{variable_filter_size_up_block.3} parent=0 // loop_body
    %s14 = ssub.s32 %s9, 1
    %s15 = ssub.s32 %s9, 2
    %s16 = sadd.s32 %s9, 1
    %s17 = ssub.s32 %s9, %s16
    %p18 = scmp.eq.s32.totalorder %s17, 0
    %s20 = sadd.s32 %s19, 1
    %s21 = scalar_select %p18, %s19, %s20
    %p24 = pneg %p18
    %p25 = scmp.eq.s32.totalorder %s9, 3
    %p26 = por %p24, %p25
    %p27 = scmp.ne.s32.totalorder %s19, %s22
    %p28 = scmp.eq.s32.totalorder %s9, 0
    %p29 = por %p27, %p28
    %p30 = scmp.ne.s32.totalorder %s19, %s22
    %p31 = scmp.eq.s32.totalorder %s14, 3
    %p32 = por %p30, %p31
    %p33 = scmp.ne.s32.totalorder %s22, %s23
    %p34 = scmp.eq.s32.totalorder %s14, 0
    %p35 = por %p33, %p34
    %p36 = scmp.ne.s32.totalorder %s22, %s23
    %p37 = scmp.eq.s32.totalorder %s15, 3
    %p38 = por %p36, %p37
    %p40 = scmp.ne.s32.totalorder %s23, %s39
    %p41 = scmp.eq.s32.totalorder %s15, 0
    %p42 = por %p40, %p41
    %s44 = sadd.s32 %s43, 1
    %p47 = scmp.eq.s32.totalorder %s9, 3
    %p48 = scmp.ne.s32.totalorder %s43, %s45
    %p49 = scmp.eq.s32.totalorder %s9, 0
    %p50 = por %p48, %p49
    %p51 = scmp.ne.s32.totalorder %s43, %s45
    %p52 = scmp.eq.s32.totalorder %s14, 3
    %p53 = por %p51, %p52
    %p54 = scmp.ne.s32.totalorder %s45, %s46
    %p55 = scmp.eq.s32.totalorder %s14, 0
    %p56 = por %p54, %p55
    %p57 = scmp.ne.s32.totalorder %s45, %s46
    %p58 = scmp.eq.s32.totalorder %s15, 3
    %p59 = por %p57, %p58
    %p61 = scmp.ne.s32.totalorder %s46, %s60
    %p62 = scmp.eq.s32.totalorder %s15, 0
    %p63 = por %p61, %p62
    %s65 = sadd.s32 %s64, 1
    %p68 = scmp.eq.s32.totalorder %s9, 3
    %p69 = scmp.ne.s32.totalorder %s64, %s66
    %p70 = scmp.eq.s32.totalorder %s9, 0
    %p71 = por %p69, %p70
    %p72 = scmp.ne.s32.totalorder %s64, %s66
    %p73 = scmp.eq.s32.totalorder %s14, 3
    %p74 = por %p72, %p73
    %p75 = scmp.ne.s32.totalorder %s66, %s67
    %p76 = scmp.eq.s32.totalorder %s14, 0
    %p77 = por %p75, %p76
    %p78 = scmp.ne.s32.totalorder %s66, %s67
    %p79 = scmp.eq.s32.totalorder %s15, 3
    %p80 = por %p78, %p79
    %p82 = scmp.ne.s32.totalorder %s67, %s81
    %p83 = scmp.eq.s32.totalorder %s15, 0
    %p84 = por %p82, %p83
    %s85 = ssub.s32 %s9, %s16
    %p86 = scmp.eq.s32.totalorder %s85, 0
    %s88 = sadd.s32 %s87, 1
    %s89 = scalar_select %p86, %s87, %s88
    %p92 = pneg %p86
    %p93 = scmp.eq.s32.totalorder %s9, 3
    %p94 = por %p92, %p93
    %p95 = scmp.ne.s32.totalorder %s87, %s90
    %p96 = scmp.eq.s32.totalorder %s9, 0
    %p97 = por %p95, %p96
    %p98 = scmp.ne.s32.totalorder %s87, %s90
    %p99 = scmp.eq.s32.totalorder %s14, 3
    %p100 = por %p98, %p99
    %p101 = scmp.ne.s32.totalorder %s90, %s91
    %p102 = scmp.eq.s32.totalorder %s14, 0
    %p103 = por %p101, %p102
    %p104 = scmp.ne.s32.totalorder %s90, %s91
    %p105 = scmp.eq.s32.totalorder %s15, 3
    %p106 = por %p104, %p105
    %p108 = scmp.ne.s32.totalorder %s91, %s107
    %p109 = scmp.eq.s32.totalorder %s15, 0
    %p110 = por %p108, %p109
    %p111 = scmp.le.s32.totalorder 1, %s9
    %p112 = scmp.lt.s32.totalorder %s9, 5
    %p113 = pnand %p111, %p112
    %p114 = pneg %p113
    // Predicated region
    $region9: #{variable_filter_size_up_block.3} parent=5 // pred_check
      _
    $region10: #{variable_filter_size_up_block.3} parent=5 // pred_check_branch
      %116 = sbr.rel (%p113) target = $region12
    $region11: #{variable_filter_size_up_block.3} parent=5 // pred_region
      %s117 = ssub.s32 %s9, 1
      // Predicated region
      $region13: #{variable_filter_size_up_block.3} parent=11 // pred_check
        %p118 = pneg %p56
      $region14: #{variable_filter_size_up_block.3} parent=11 // pred_check_branch
        %120 = sbr.rel (%p118) target = $region16
      $region15: #{variable_filter_size_up_block.3} parent=11 // pred_region
        _
      $region16: #{variable_filter_size_up_block.3} parent=11 // pred_fallthru
        _
      // Predicated region
      $region17: #{variable_filter_size_up_block.3} parent=11 // pred_check
        %p121 = pneg %p77
      $region18: #{variable_filter_size_up_block.3} parent=11 // pred_check_branch
        %123 = sbr.rel (%p121) target = $region20
      $region19: #{variable_filter_size_up_block.3} parent=11 // pred_region
        _
      $region20: #{variable_filter_size_up_block.3} parent=11 // pred_fallthru
        _
    $region12: #{variable_filter_size_up_block.3} parent=5 // pred_fallthru
      _
    %p124 = scmp.lt.s32.totalorder %s9, 4
    // Predicated region
    $region21: #{variable_filter_size_up_block.3} parent=5 // pred_check
      %p125 = pneg %p124
    $region22: #{variable_filter_size_up_block.3} parent=5 // pred_check_branch
      %127 = sbr.rel (%p125) target = $region24
    $region23: #{variable_filter_size_up_block.3} parent=5 // pred_region
      // Predicated region
      $region25: #{variable_filter_size_up_block.3} parent=23 // pred_check
        %p128 = pneg %p29
      $region26: #{variable_filter_size_up_block.3} parent=23 // pred_check_branch
        %130 = sbr.rel (%p128) target = $region28
      $region27: #{variable_filter_size_up_block.3} parent=23 // pred_region
        %p131 = scmp.lt.s32.totalorder %s9, 3
        %s132 = scalar_select %p131, %s9, 3
        %s133 = smul.addr %s132, 4
        %s134 = smul.addr %s133, 8
        %s135 = scalar_lea.vmem %s0, %s134
      $region28: #{variable_filter_size_up_block.3} parent=23 // pred_fallthru
        _
    $region24: #{variable_filter_size_up_block.3} parent=5 // pred_fallthru
      _
    %p136 = scmp.le.s32.totalorder 1, %s9
    %p137 = scmp.lt.s32.totalorder %s9, 5
    %p138 = pnand %p136, %p137
    %p139 = pneg %p138
    // Predicated region
    $region29: #{variable_filter_size_up_block.3} parent=5 // pred_check
      _
    $region30: #{variable_filter_size_up_block.3} parent=5 // pred_check_branch
      %141 = sbr.rel (%p138) target = $region32
    $region31: #{variable_filter_size_up_block.3} parent=5 // pred_region
      %s142 = ssub.s32 %s9, 1
      %p143 = scmp.lt.s32.totalorder %s14, 3
      %s144 = scalar_select %p143, %s14, 3
      %s145 = smul.addr %s144, 4
      %s146 = smul.addr %s145, 8
      %s147 = scalar_lea.vmem %s0, %s146
      %p148 = pneg %p35
      %p149 = pneg %p32
      %p150 = pneg %p56
      %p151 = pneg %p53
      %p152 = pneg %p77
      %p153 = pneg %p74
      %p154 = pneg %p103
      %p155 = pneg %p100
      %p156 = scmp.lt.s32.totalorder %s14, 3
      %s157 = scalar_select %p156, %s14, 3
      %s158 = smul.addr %s157, 4
      %s159 = smul.addr %s158, 8
      %s160 = scalar_lea.vmem %s3, %s159
      %p161 = scmp.lt.s32.totalorder %s14, 3
      %s162 = scalar_select %p161, %s14, 3
      %s163 = smul.addr %s162, 4
      %s164 = smul.addr %s163, 8
      %s165 = scalar_lea.vmem %s0, %s164
      %p166 = scmp.lt.s32.totalorder %s14, 3
      %s167 = scalar_select %p166, %s14, 3
      %s168 = smul.addr %s167, 4
      %s169 = smul.addr %s168, 8
      %s170 = scalar_lea.vmem %s3, %s169
      %v171 = vld [vmem:[%s165] sm:$0xff]
      %v172 = vld [vmem:[%s165 + $0x8] sm:$0xff]
      %v173 = vld [vmem:[%s165 + $0x10] sm:$0xff]
      %v174 = vld [vmem:[%s165 + $0x18] sm:$0xff]
      %v175 = vld [vmem:[%s1] sm:$0xf]
      %v177 = vlaneseq
      %v178 = vshrl.u32 %v177, 7
      %v179 = vsub.s32 0, %v178
      %v180 = vrot.slane %v175, %v179
      %v181 = vlaneseq
      %v182 = vshrl.u32 %v181, 7
      %v183 = vsub.s32 1, %v182
      %v184 = vrot.slane %v175, %v183
      %v185 = vlaneseq
      %v186 = vshrl.u32 %v185, 7
      %v187 = vsub.s32 2, %v186
      %v188 = vrot.slane %v175, %v187
      %v189 = vlaneseq
      %v190 = vshrl.u32 %v189, 7
      %v191 = vsub.s32 3, %v190
      %v192 = vrot.slane %v175, %v191
      %v197 = vmul.f32 %v171, %v180
      %v198 = vmul.f32 %v172, %v184
      %v199 = vmul.f32 %v173, %v188
      %v200 = vmul.f32 %v174, %v192
      %v201 = vld [vmem:[%s2] sm:$0xf]
      %v203 = vlaneseq
      %v204 = vshrl.u32 %v203, 7
      %v205 = vsub.s32 0, %v204
      %v206 = vrot.slane %v201, %v205
      %v207 = vlaneseq
      %v208 = vshrl.u32 %v207, 7
      %v209 = vsub.s32 1, %v208
      %v210 = vrot.slane %v201, %v209
      %v211 = vlaneseq
      %v212 = vshrl.u32 %v211, 7
      %v213 = vsub.s32 2, %v212
      %v214 = vrot.slane %v201, %v213
      %v215 = vlaneseq
      %v216 = vshrl.u32 %v215, 7
      %v217 = vsub.s32 3, %v216
      %v218 = vrot.slane %v201, %v217
      %v223 = vadd.f32 %v197, %v206
      %v224 = vadd.f32 %v198, %v210
      %v225 = vadd.f32 %v199, %v214
      %v226 = vadd.f32 %v200, %v218
      %v227 = vmax.f32 %v223, 0.0
      %v228 = vmax.f32 %v224, 0.0
      %v229 = vmax.f32 %v225, 0.0
      %v230 = vmax.f32 %v226, 0.0
      %231 = vst [vmem:[%s170] sm:$0xff] %v227
      %232 = vst [vmem:[%s170 + $0x8] sm:$0xff] %v228
      %233 = vst [vmem:[%s170 + $0x10] sm:$0xff] %v229
      %234 = vst [vmem:[%s170 + $0x18] sm:$0xff] %v230
      %p235 = scmp.lt.s32.totalorder %s14, 3
      %s236 = scalar_select %p235, %s14, 3
      %s237 = smul.addr %s236, 4
      %s238 = smul.addr %s237, 8
      %s239 = scalar_lea.vmem %s3, %s238
      // Predicated region
      $region33: #{variable_filter_size_up_block.3} parent=31 // pred_check
        %p240 = pneg %p100
      $region34: #{variable_filter_size_up_block.3} parent=31 // pred_check_branch
        %242 = sbr.rel (%p240) target = $region36
      $region35: #{variable_filter_size_up_block.3} parent=31 // pred_region
        _
      $region36: #{variable_filter_size_up_block.3} parent=31 // pred_fallthru
        _
    $region32: #{variable_filter_size_up_block.3} parent=5 // pred_fallthru
      _
    %p243 = scmp.le.s32.totalorder 2, %s9
    // Predicated region
    $region37: #{variable_filter_size_up_block.3} parent=5 // pred_check
      %p244 = pneg %p243
    $region38: #{variable_filter_size_up_block.3} parent=5 // pred_check_branch
      %246 = sbr.rel (%p244) target = $region40
    $region39: #{variable_filter_size_up_block.3} parent=5 // pred_region
      %s247 = ssub.s32 %s9, 2
      // Predicated region
      $region41: #{variable_filter_size_up_block.3} parent=39 // pred_check
        %p248 = pneg %p106
      $region42: #{variable_filter_size_up_block.3} parent=39 // pred_check_branch
        %250 = sbr.rel (%p248) target = $region44
      $region43: #{variable_filter_size_up_block.3} parent=39 // pred_region
        %p251 = scmp.lt.s32.totalorder %s15, 3
        %s252 = scalar_select %p251, %s15, 3
        %s253 = smul.addr %s252, 4
        %s254 = smul.addr %s253, 8
        %s255 = scalar_lea.vmem %s3, %s254
      $region44: #{variable_filter_size_up_block.3} parent=39 // pred_fallthru
        _
    $region40: #{variable_filter_size_up_block.3} parent=5 // pred_fallthru
      _
  $region6: #{variable_filter_size_up_block.3} parent=0 // loop_footer
    %s13 = sadd.s32 1, %s9
  $region7: #{variable_filter_size_up_block.3} parent=0 // loop_footer_branch
    %8 = sbr.rel target = $region3
  $region8: #{variable_filter_size_up_block.3} parent=0 // loop_exit
    _

// kernel: variable_filter_size_up_block.2
$region0: #{variable_filter_size_up_block.2}
  #allocation0 [shape = 'u32[]', space=smem, size = 0x4, offset = 0x4, fixed_abs, tag = 'smem constant byte address 0x4 - core index']
  #allocation1 [shape = 'u32[144,128]{1,0:T(1,128)}', space=vmem, size = 0x12000, scoped, tag = 'internal scratch']
  %s0 = inlined_call_operand.vmem [shape: f32[2,20,80], index: 0, kind: input, shape index: {}]
  %s1 = inlined_call_operand.vmem [shape: bf16[5,80,512], index: 1, kind: input, shape index: {}]
  %s2 = inlined_call_operand.vmem [shape: f32[2,16,512], index: 2, kind: output, shape index: {0}]
  %s3 = inlined_call_operand.vmem [shape: f32[2,2,512], index: 3, kind: output, shape index: {1}]
  %4 = xla_tuple %s2, %s3
  %s5 = sld [smem:[#allocation0]]
  $region53: #{variable_filter_size_up_block.2} parent=0
    _
  %s7 = ssub.s32 1, %s5
  %s8 = scalar_select 0, %s7, %s5
  loop: start=0, step=1, limit=6
  $region2: #{variable_filter_size_up_block.2} parent=0 // loop_pre_header
    _
  $region3: #{variable_filter_size_up_block.2} parent=0 // loop_header
    %s10 = sphi 0, %s14
    %p11 = scmp.ge.s32.totalorder %s10, 6
    %s17 = sphi 0, %s29
    %s18 = sphi 0, %s25
    %s19 = sphi 0, %s17
    %s20 = sphi 0, %s18
    %s21 = sphi 0, %s19
    %s22 = sphi 0, %s20
    %s32 = sphi 0, %s34
    %s35 = sphi 0, %s32
    %s36 = sphi 0, %s35
    %s52 = sphi 0, %s36
    %s56 = sphi 0, %s56
    %s58 = sphi 0, %s56
    %s59 = sphi 0, %s58
    %s73 = sphi 0, %s59
    %s81 = sphi 0, %s83
    %s84 = sphi 0, %s81
    %s85 = sphi 0, %s84
    %s101 = sphi 0, %s85
    %s107 = sphi 0, %s109
    %s110 = sphi 0, %s107
    %s111 = sphi 0, %s110
    %s127 = sphi 0, %s111
  $region4: #{variable_filter_size_up_block.2} parent=0 // loop_header_branch
    %13 = sbr.rel (%p11) target = $region8
  $region5: #{variable_filter_size_up_block.2} parent=0 // loop_body
    %s15 = ssub.s32 %s10, 1
    %s16 = ssub.s32 %s10, 2
    %s23 = sadd.s32 1, %s18
    %p24 = scmp.ge.s32.totalorder %s23, 2
    %s25 = scalar_select %p24, 0, %s23
    %s26 = sadd.s32 1, %s17
    %s27 = scalar_select %p24, %s26, %s17
    %p28 = scmp.ge.s32.totalorder %s27, 2
    %s29 = scalar_select %p28, 0, %s27
    %s30 = ssub.s32 %s17, %s29
    %p31 = scmp.eq.s32.totalorder %s30, 0
    %s33 = sadd.s32 %s32, 1
    %s34 = scalar_select %p31, %s32, %s33
    %p37 = pneg %p31
    %p38 = scmp.eq.s32.totalorder %s10, 3
    %p39 = por %p37, %p38
    %p40 = scmp.ne.s32.totalorder %s32, %s35
    %p41 = scmp.eq.s32.totalorder %s10, 0
    %p42 = por %p40, %p41
    %p43 = scmp.ne.s32.totalorder %s32, %s35
    %p44 = scmp.eq.s32.totalorder %s15, 3
    %p45 = por %p43, %p44
    %p46 = scmp.ne.s32.totalorder %s35, %s36
    %p47 = scmp.eq.s32.totalorder %s15, 0
    %p48 = por %p46, %p47
    %p49 = scmp.ne.s32.totalorder %s35, %s36
    %p50 = scmp.eq.s32.totalorder %s16, 3
    %p51 = por %p49, %p50
    %p53 = scmp.ne.s32.totalorder %s36, %s52
    %p54 = scmp.eq.s32.totalorder %s16, 0
    %p55 = por %p53, %p54
    %s57 = sadd.s32 %s56, 1
    %p60 = scmp.eq.s32.totalorder %s10, 3
    %p61 = scmp.ne.s32.totalorder %s56, %s58
    %p62 = scmp.eq.s32.totalorder %s10, 0
    %p63 = por %p61, %p62
    %p64 = scmp.ne.s32.totalorder %s56, %s58
    %p65 = scmp.eq.s32.totalorder %s15, 3
    %p66 = por %p64, %p65
    %p67 = scmp.ne.s32.totalorder %s58, %s59
    %p68 = scmp.eq.s32.totalorder %s15, 0
    %p69 = por %p67, %p68
    %p70 = scmp.ne.s32.totalorder %s58, %s59
    %p71 = scmp.eq.s32.totalorder %s16, 3
    %p72 = por %p70, %p71
    %p74 = scmp.ne.s32.totalorder %s59, %s73
    %p75 = scmp.eq.s32.totalorder %s16, 0
    %p76 = por %p74, %p75
    %s77 = ssub.s32 %s17, %s29
    %s78 = ssub.s32 %s18, %s25
    %s79 = sor.u32 %s77, %s78
    %p80 = scmp.eq.s32.totalorder %s79, 0
    %s82 = sadd.s32 %s81, 1
    %s83 = scalar_select %p80, %s81, %s82
    %p86 = pneg %p80
    %p87 = scmp.eq.s32.totalorder %s10, 3
    %p88 = por %p86, %p87
    %p89 = scmp.ne.s32.totalorder %s81, %s84
    %p90 = scmp.eq.s32.totalorder %s10, 0
    %p91 = por %p89, %p90
    %p92 = scmp.ne.s32.totalorder %s81, %s84
    %p93 = scmp.eq.s32.totalorder %s15, 3
    %p94 = por %p92, %p93
    %p95 = scmp.ne.s32.totalorder %s84, %s85
    %p96 = scmp.eq.s32.totalorder %s15, 0
    %p97 = por %p95, %p96
    %p98 = scmp.ne.s32.totalorder %s84, %s85
    %p99 = scmp.eq.s32.totalorder %s16, 3
    %p100 = por %p98, %p99
    %p102 = scmp.ne.s32.totalorder %s85, %s101
    %p103 = scmp.eq.s32.totalorder %s16, 0
    %p104 = por %p102, %p103
    %s105 = ssub.s32 %s17, %s29
    %p106 = scmp.eq.s32.totalorder %s105, 0
    %s108 = sadd.s32 %s107, 1
    %s109 = scalar_select %p106, %s107, %s108
    %p112 = pneg %p106
    %p113 = scmp.eq.s32.totalorder %s10, 3
    %p114 = por %p112, %p113
    %p115 = scmp.ne.s32.totalorder %s107, %s110
    %p116 = scmp.eq.s32.totalorder %s10, 0
    %p117 = por %p115, %p116
    %p118 = scmp.ne.s32.totalorder %s107, %s110
    %p119 = scmp.eq.s32.totalorder %s15, 3
    %p120 = por %p118, %p119
    %p121 = scmp.ne.s32.totalorder %s110, %s111
    %p122 = scmp.eq.s32.totalorder %s15, 0
    %p123 = por %p121, %p122
    %p124 = scmp.ne.s32.totalorder %s110, %s111
    %p125 = scmp.eq.s32.totalorder %s16, 3
    %p126 = por %p124, %p125
    %p128 = scmp.ne.s32.totalorder %s111, %s127
    %p129 = scmp.eq.s32.totalorder %s16, 0
    %p130 = por %p128, %p129
    %p131 = scmp.le.s32.totalorder 1, %s10
    %p132 = scmp.lt.s32.totalorder %s10, 5
    %p133 = pnand %p131, %p132
    %p134 = pneg %p133
    // Predicated region
    $region9: #{variable_filter_size_up_block.2} parent=5 // pred_check
      _
    $region10: #{variable_filter_size_up_block.2} parent=5 // pred_check_branch
      %136 = sbr.rel (%p133) target = $region12
    $region11: #{variable_filter_size_up_block.2} parent=5 // pred_region
      %s137 = ssub.s32 %s10, 1
      // Predicated region
      $region13: #{variable_filter_size_up_block.2} parent=11 // pred_check
        %p138 = pneg %p69
      $region14: #{variable_filter_size_up_block.2} parent=11 // pred_check_branch
        %140 = sbr.rel (%p138) target = $region16
      $region15: #{variable_filter_size_up_block.2} parent=11 // pred_region
        _
      $region16: #{variable_filter_size_up_block.2} parent=11 // pred_fallthru
        _
    $region12: #{variable_filter_size_up_block.2} parent=5 // pred_fallthru
      _
    %p141 = scmp.lt.s32.totalorder %s10, 4
    // Predicated region
    $region17: #{variable_filter_size_up_block.2} parent=5 // pred_check
      %p142 = pneg %p141
    $region18: #{variable_filter_size_up_block.2} parent=5 // pred_check_branch
      %144 = sbr.rel (%p142) target = $region20
    $region19: #{variable_filter_size_up_block.2} parent=5 // pred_region
      // Predicated region
      $region21: #{variable_filter_size_up_block.2} parent=19 // pred_check
        %p145 = pneg %p42
      $region22: #{variable_filter_size_up_block.2} parent=19 // pred_check_branch
        %147 = sbr.rel (%p145) target = $region24
      $region23: #{variable_filter_size_up_block.2} parent=19 // pred_region
        %p148 = scmp.lt.s32.totalorder %s17, 1
        %s149 = scalar_select %p148, %s17, 1
        %s150 = smul.addr %s149, 3
        %s151 = smul.addr %s150, 8
        %s152 = scalar_lea.vmem %s0, %s151
      $region24: #{variable_filter_size_up_block.2} parent=19 // pred_fallthru
        _
    $region20: #{variable_filter_size_up_block.2} parent=5 // pred_fallthru
      _
    %p153 = scmp.le.s32.totalorder 1, %s10
    %p154 = scmp.lt.s32.totalorder %s10, 5
    %p155 = pnand %p153, %p154
    %p156 = pneg %p155
    // Predicated region
    $region25: #{variable_filter_size_up_block.2} parent=5 // pred_check
      _
    $region26: #{variable_filter_size_up_block.2} parent=5 // pred_check_branch
      %158 = sbr.rel (%p155) target = $region28
    $region27: #{variable_filter_size_up_block.2} parent=5 // pred_region
      %s159 = ssub.s32 %s10, 1
      %p160 = scmp.lt.s32.totalorder %s19, 1
      %s161 = scalar_select %p160, %s19, 1
      %s162 = smul.addr %s161, 3
      %s163 = smul.addr %s162, 8
      %s164 = scalar_lea.vmem %s0, %s163
      %p165 = pneg %p48
      %p166 = pneg %p45
      %p167 = pneg %p69
      %p168 = pneg %p66
      %p169 = pneg %p97
      %p170 = pneg %p94
      %p171 = scmp.lt.s32.totalorder %s19, 1
      %s172 = scalar_select %p171, %s19, 1
      %p173 = scmp.lt.s32.totalorder %s20, 1
      %s174 = scalar_select %p173, %s20, 1
      %s175 = smul.addr %s174, 4
      %s176 = smul.addr %s172, 8
      %s177 = sadd.s32 %s175, %s176
      %s178 = smul.addr %s177, 8
      %s179 = scalar_lea.vmem %s2, %s178
      %p180 = pneg %p123
      %p181 = pneg %p120
      %p182 = scmp.lt.s32.totalorder %s19, 1
      %s183 = scalar_select %p182, %s19, 1
      %s184 = smul.addr %s183, 4
      %s185 = smul.addr %s184, 2
      %s186 = scalar_lea.vmem %s3, %s185
      %p187 = scmp.lt.s32.totalorder %s19, 1
      %s188 = scalar_select %p187, %s19, 1
      %s189 = smul.addr %s188, 3
      %s190 = smul.addr %s189, 8
      %s191 = scalar_lea.vmem %s0, %s190
      %p192 = scmp.lt.s32.totalorder %s19, 1
      %s193 = scalar_select %p192, %s19, 1
      %p194 = scmp.lt.s32.totalorder %s20, 1
      %s195 = scalar_select %p194, %s20, 1
      %s196 = smul.addr %s195, 4
      %s197 = smul.addr %s193, 8
      %s198 = sadd.s32 %s196, %s197
      %s199 = smul.addr %s198, 8
      %s200 = scalar_lea.vmem %s2, %s199
      %p201 = scmp.lt.s32.totalorder %s19, 1
      %s202 = scalar_select %p201, %s19, 1
      %s203 = smul.addr %s202, 4
      %s204 = smul.addr %s203, 2
      %s205 = scalar_lea.vmem %s3, %s204
      %p207 = scmp.eq.s32.totalorder %s20, 0
      // Predicated region
      $region29: #{variable_filter_size_up_block.2} parent=27 // pred_check
        %p208 = pneg %p207
      $region30: #{variable_filter_size_up_block.2} parent=27 // pred_check_branch
        %210 = sbr.rel (%p208) target = $region32
      $region31: #{variable_filter_size_up_block.2} parent=27 // pred_region
        %211 = vst [vmem:[%s205] sm:$0xff] 0.0
      $region32: #{variable_filter_size_up_block.2} parent=27 // pred_fallthru
        _
      %s212 = smul.u32 %s20, 8
      %s213 = scalar_lea.vmem %s191, %s212
      %v214 = vld [vmem:[%s213] sm:$0xff]
      %v215 = vpack.c.bf16 %v214, %v214
      %v216 = vld [vmem:[%s1] sm:$0xff]
      %v217 = vld [vmem:[%s1 + $0x8] sm:$0xff]
      %v218 = vld [vmem:[%s1 + $0x10] sm:$0xff]
      %v219 = vld [vmem:[%s1 + $0x18] sm:$0xff]
      %v220 = vld [vmem:[%s1 + $0x20] sm:$0xff]
      %v221 = vld [vmem:[%s1 + $0x28] sm:$0xff]
      %v222 = vld [vmem:[%s1 + $0x30] sm:$0xff]
      %v223 = vld [vmem:[%s1 + $0x38] sm:$0xff]
      %v224 = vld [vmem:[%s1 + $0x40] sm:$0xff]
      %v225 = vld [vmem:[%s1 + $0x48] sm:$0xff]
      %v226 = vld [vmem:[%s1 + $0x50] sm:$0xff]
      %v227 = vld [vmem:[%s1 + $0x58] sm:$0xff]
      %v228 = vld [vmem:[%s1 + $0x60] sm:$0xff]
      %v229 = vld [vmem:[%s1 + $0x68] sm:$0xff]
      %v230 = vld [vmem:[%s1 + $0x70] sm:$0xff]
      %v231 = vld [vmem:[%s1 + $0x78] sm:$0xff]
      %v232 = vld [vmem:[%s1 + $0x80] sm:$0xff]
      %v233 = vld [vmem:[%s1 + $0x88] sm:$0xff]
      %v234 = vld [vmem:[%s1 + $0x90] sm:$0xff]
      %v235 = vld [vmem:[%s1 + $0x98] sm:$0xff]
      %s236 = sadd.s32 %s212, 1
      %s237 = scalar_lea.vmem %s191, %s236
      %v238 = vld [vmem:[%s237] sm:$0xff]
      %v239 = vpack.c.bf16 %v238, %v238
      %s240 = scalar_lea.vmem %s1, 160
      %v241 = vld [vmem:[%s240] sm:$0xff]
      %v242 = vld [vmem:[%s240 + $0x8] sm:$0xff]
      %v243 = vld [vmem:[%s240 + $0x10] sm:$0xff]
      %v244 = vld [vmem:[%s240 + $0x18] sm:$0xff]
      %v245 = vld [vmem:[%s240 + $0x20] sm:$0xff]
      %v246 = vld [vmem:[%s240 + $0x28] sm:$0xff]
      %v247 = vld [vmem:[%s240 + $0x30] sm:$0xff]
      %v248 = vld [vmem:[%s240 + $0x38] sm:$0xff]
      %v249 = vld [vmem:[%s240 + $0x40] sm:$0xff]
      %v250 = vld [vmem:[%s240 + $0x48] sm:$0xff]
      %v251 = vld [vmem:[%s240 + $0x50] sm:$0xff]
      %v252 = vld [vmem:[%s240 + $0x58] sm:$0xff]
      %v253 = vld [vmem:[%s240 + $0x60] sm:$0xff]
      %v254 = vld [vmem:[%s240 + $0x68] sm:$0xff]
      %v255 = vld [vmem:[%s240 + $0x70] sm:$0xff]
      %v256 = vld [vmem:[%s240 + $0x78] sm:$0xff]
      %v257 = vld [vmem:[%s240 + $0x80] sm:$0xff]
      %v258 = vld [vmem:[%s240 + $0x88] sm:$0xff]
      %v259 = vld [vmem:[%s240 + $0x90] sm:$0xff]
      %v260 = vld [vmem:[%s240 + $0x98] sm:$0xff]
      %v281 = vunpack.c.l.b16 %v241
      %v282 = vunpack.c.h.b16 %v241
      %v283 = vunpack.c.l.b16 %v242
      %v284 = vunpack.c.h.b16 %v242
      %v285 = vunpack.c.l.b16 %v243
      %v286 = vunpack.c.h.b16 %v243
      %v287 = vunpack.c.l.b16 %v244
      %v288 = vunpack.c.h.b16 %v244
      %v289 = vunpack.c.l.b16 %v245
      %v290 = vunpack.c.h.b16 %v245
      %v291 = vunpack.c.l.b16 %v246
      %v292 = vunpack.c.h.b16 %v246
      %v293 = vunpack.c.l.b16 %v247
      %v294 = vunpack.c.h.b16 %v247
      %v295 = vunpack.c.l.b16 %v248
      %v296 = vunpack.c.h.b16 %v248
      %v297 = vunpack.c.l.b16 %v249
      %v298 = vunpack.c.h.b16 %v249
      %v299 = vunpack.c.l.b16 %v250
      %v300 = vunpack.c.h.b16 %v250
      %v301 = vunpack.c.l.b16 %v251
      %v302 = vunpack.c.h.b16 %v251
      %v303 = vunpack.c.l.b16 %v252
      %v304 = vunpack.c.h.b16 %v252
      %v305 = vunpack.c.l.b16 %v253
      %v306 = vunpack.c.h.b16 %v253
      %v307 = vunpack.c.l.b16 %v254
      %v308 = vunpack.c.h.b16 %v254
      %v309 = vunpack.c.l.b16 %v255
      %v310 = vunpack.c.h.b16 %v255
      %v311 = vunpack.c.l.b16 %v256
      %v312 = vunpack.c.h.b16 %v256
      %v313 = vunpack.c.l.b16 %v257
      %v314 = vunpack.c.h.b16 %v257
      %v315 = vunpack.c.l.b16 %v258
      %v316 = vunpack.c.h.b16 %v258
      %v317 = vunpack.c.l.b16 %v259
      %v318 = vunpack.c.h.b16 %v259
      %v319 = vunpack.c.l.b16 %v260
      %v320 = vunpack.c.h.b16 %v260
      %v321 = vpack.c.b16 %v285, %v281
      %v322 = vpack.c.b16 %v286, %v282
      %v323 = vpack.c.b16 %v287, %v283
      %v324 = vpack.c.b16 %v288, %v284
      %v325 = vpack.c.b16 %v293, %v289
      %v326 = vpack.c.b16 %v294, %v290
      %v327 = vpack.c.b16 %v295, %v291
      %v328 = vpack.c.b16 %v296, %v292
      %v329 = vpack.c.b16 %v301, %v297
      %v330 = vpack.c.b16 %v302, %v298
      %v331 = vpack.c.b16 %v303, %v299
      %v332 = vpack.c.b16 %v304, %v300
      %v333 = vpack.c.b16 %v309, %v305
      %v334 = vpack.c.b16 %v310, %v306
      %v335 = vpack.c.b16 %v311, %v307
      %v336 = vpack.c.b16 %v312, %v308
      %v337 = vpack.c.b16 %v317, %v313
      %v338 = vpack.c.b16 %v318, %v314
      %v339 = vpack.c.b16 %v319, %v315
      %v340 = vpack.c.b16 %v320, %v316
      %vm361 = vcmask 654336
      %v363 = vsel %vm361, %v239, 0
      %365 = vmatprep.subr.bf16.mxu0 %v322
      %366 = vmatpush1.bf16.msra.mxu0 %v321
      %367 = vmatprep.subr.bf16.mxu0 %v326
      %368 = vmatpush1.bf16.msra.mxu0 %v325
      %369 = vmatprep.subr.bf16.mxu0 %v330
      %370 = vmatpush1.bf16.msra.mxu0 %v329
      %371 = vmatprep.subr.bf16.mxu0 %v334
      %372 = vmatpush1.bf16.msra.mxu0 %v333
      %373 = vmatprep.subr.bf16.mxu0 %v338
      %374 = vmatpush1.bf16.msra.mxu0 %v337
      %375 = vmatprep.subr.bf16.mxu0 0
      %376 = vmatpush1.bf16.msra.mxu0 0
      %377 = vmatprep.subr.bf16.mxu0 0
      %378 = vmatpush1.bf16.msra.mxu0 0
      %379 = vmatprep.subr.bf16.mxu0 0
      %380 = vmatpush1.bf16.msra.mxu0 0
      %381 = vmatprep.subr.bf16.mxu0 0
      %382 = vmatpush1.bf16.msra.mxu0 0
      %383 = vmatprep.subr.bf16.mxu0 0
      %384 = vmatpush1.bf16.msra.mxu0 0
      %385 = vmatprep.subr.bf16.mxu0 0
      %386 = vmatpush1.bf16.msra.mxu0 0
      %387 = vmatprep.subr.bf16.mxu0 0
      %388 = vmatpush1.bf16.msra.mxu0 0
      %389 = vmatprep.subr.bf16.mxu0 0
      %390 = vmatpush1.bf16.msra.mxu0 0
      %391 = vmatprep.subr.bf16.mxu0 0
      %392 = vmatpush1.bf16.msra.mxu0 0
      %393 = vmatprep.subr.bf16.mxu0 0
      %394 = vmatpush1.bf16.msra.mxu0 0
      %395 = vmatprep.subr.bf16.mxu0 0
      %396 = vmatpush1.bf16.msra.mxu0 0
      %397 = vmatprep.mubr.bf16.mxu0 0
      %398 = vmatmul.mubr.bf16.gmra.mrb[0].mxu0 %v363
      %v399 = vpop.f32.mrb[0].mxu0
      %v400 = vadd.f32 0.0, %v399
      %v401 = vpop.f32.mrb[0].mxu0
      %v402 = vadd.f32 0.0, %v401
      %v403 = vpop.f32.mrb[0].mxu0
      %v404 = vpop.f32.mrb[0].mxu0
      %405 = vdwg.mxu0
      %406 = vmatprep.subr.bf16.mxu0 %v324
      %407 = vmatpush1.bf16.msra.mxu0 %v323
      %408 = vmatprep.subr.bf16.mxu0 %v328
      %409 = vmatpush1.bf16.msra.mxu0 %v327
      %410 = vmatprep.subr.bf16.mxu0 %v332
      %411 = vmatpush1.bf16.msra.mxu0 %v331
      %412 = vmatprep.subr.bf16.mxu0 %v336
      %413 = vmatpush1.bf16.msra.mxu0 %v335
      %414 = vmatprep.subr.bf16.mxu0 %v340
      %415 = vmatpush1.bf16.msra.mxu0 %v339
      %416 = vmatprep.subr.bf16.mxu0 0
      %417 = vmatpush1.bf16.msra.mxu0 0
      %418 = vmatprep.subr.bf16.mxu0 0
      %419 = vmatpush1.bf16.msra.mxu0 0
      %420 = vmatprep.subr.bf16.mxu0 0
      %421 = vmatpush1.bf16.msra.mxu0 0
      %422 = vmatprep.subr.bf16.mxu0 0
      %423 = vmatpush1.bf16.msra.mxu0 0
      %424 = vmatprep.subr.bf16.mxu0 0
      %425 = vmatpush1.bf16.msra.mxu0 0
      %426 = vmatprep.subr.bf16.mxu0 0
      %427 = vmatpush1.bf16.msra.mxu0 0
      %428 = vmatprep.subr.bf16.mxu0 0
      %429 = vmatpush1.bf16.msra.mxu0 0
      %430 = vmatprep.subr.bf16.mxu0 0
      %431 = vmatpush1.bf16.msra.mxu0 0
      %432 = vmatprep.subr.bf16.mxu0 0
      %433 = vmatpush1.bf16.msra.mxu0 0
      %434 = vmatprep.subr.bf16.mxu0 0
      %435 = vmatpush1.bf16.msra.mxu0 0
      %436 = vmatprep.subr.bf16.mxu0 0
      %437 = vmatpush1.bf16.msra.mxu0 0
      %438 = vmatprep.mubr.bf16.mxu0 0
      %439 = vmatmul.mubr.bf16.gmra.mrb[0].mxu0 %v363
      %v440 = vpop.f32.mrb[0].mxu0
      %v441 = vadd.f32 0.0, %v440
      %v442 = vpop.f32.mrb[0].mxu0
      %v443 = vadd.f32 0.0, %v442
      %v444 = vpop.f32.mrb[0].mxu0
      %v445 = vpop.f32.mrb[0].mxu0
      %446 = vdwg.mxu0
      %v467 = vunpack.c.l.b16 %v216
      %v468 = vunpack.c.h.b16 %v216
      %v469 = vunpack.c.l.b16 %v217
      %v470 = vunpack.c.h.b16 %v217
      %v471 = vunpack.c.l.b16 %v218
      %v472 = vunpack.c.h.b16 %v218
      %v473 = vunpack.c.l.b16 %v219
      %v474 = vunpack.c.h.b16 %v219
      %v475 = vunpack.c.l.b16 %v220
      %v476 = vunpack.c.h.b16 %v220
      %v477 = vunpack.c.l.b16 %v221
      %v478 = vunpack.c.h.b16 %v221
      %v479 = vunpack.c.l.b16 %v222
      %v480 = vunpack.c.h.b16 %v222
      %v481 = vunpack.c.l.b16 %v223
      %v482 = vunpack.c.h.b16 %v223
      %v483 = vunpack.c.l.b16 %v224
      %v484 = vunpack.c.h.b16 %v224
      %v485 = vunpack.c.l.b16 %v225
      %v486 = vunpack.c.h.b16 %v225
      %v487 = vunpack.c.l.b16 %v226
      %v488 = vunpack.c.h.b16 %v226
      %v489 = vunpack.c.l.b16 %v227
      %v490 = vunpack.c.h.b16 %v227
      %v491 = vunpack.c.l.b16 %v228
      %v492 = vunpack.c.h.b16 %v228
      %v493 = vunpack.c.l.b16 %v229
      %v494 = vunpack.c.h.b16 %v229
      %v495 = vunpack.c.l.b16 %v230
      %v496 = vunpack.c.h.b16 %v230
      %v497 = vunpack.c.l.b16 %v231
      %v498 = vunpack.c.h.b16 %v231
      %v499 = vunpack.c.l.b16 %v232
      %v500 = vunpack.c.h.b16 %v232
      %v501 = vunpack.c.l.b16 %v233
      %v502 = vunpack.c.h.b16 %v233
      %v503 = vunpack.c.l.b16 %v234
      %v504 = vunpack.c.h.b16 %v234
      %v505 = vunpack.c.l.b16 %v235
      %v506 = vunpack.c.h.b16 %v235
      %v507 = vpack.c.b16 %v471, %v467
      %v508 = vpack.c.b16 %v472, %v468
      %v509 = vpack.c.b16 %v473, %v469
      %v510 = vpack.c.b16 %v474, %v470
      %v511 = vpack.c.b16 %v479, %v475
      %v512 = vpack.c.b16 %v480, %v476
      %v513 = vpack.c.b16 %v481, %v477
      %v514 = vpack.c.b16 %v482, %v478
      %v515 = vpack.c.b16 %v487, %v483
      %v516 = vpack.c.b16 %v488, %v484
      %v517 = vpack.c.b16 %v489, %v485
      %v518 = vpack.c.b16 %v490, %v486
      %v519 = vpack.c.b16 %v495, %v491
      %v520 = vpack.c.b16 %v496, %v492
      %v521 = vpack.c.b16 %v497, %v493
      %v522 = vpack.c.b16 %v498, %v494
      %v523 = vpack.c.b16 %v503, %v499
      %v524 = vpack.c.b16 %v504, %v500
      %v525 = vpack.c.b16 %v505, %v501
      %v526 = vpack.c.b16 %v506, %v502
      %v548 = vsel %vm361, %v215, 0
      %550 = vmatprep.subr.bf16.mxu0 %v508
      %551 = vmatpush1.bf16.msra.mxu0 %v507
      %552 = vmatprep.subr.bf16.mxu0 %v512
      %553 = vmatpush1.bf16.msra.mxu0 %v511
      %554 = vmatprep.subr.bf16.mxu0 %v516
      %555 = vmatpush1.bf16.msra.mxu0 %v515
      %556 = vmatprep.subr.bf16.mxu0 %v520
      %557 = vmatpush1.bf16.msra.mxu0 %v519
      %558 = vmatprep.subr.bf16.mxu0 %v524
      %559 = vmatpush1.bf16.msra.mxu0 %v523
      %560 = vmatprep.subr.bf16.mxu0 0
      %561 = vmatpush1.bf16.msra.mxu0 0
      %562 = vmatprep.subr.bf16.mxu0 0
      %563 = vmatpush1.bf16.msra.mxu0 0
      %564 = vmatprep.subr.bf16.mxu0 0
      %565 = vmatpush1.bf16.msra.mxu0 0
      %566 = vmatprep.subr.bf16.mxu0 0
      %567 = vmatpush1.bf16.msra.mxu0 0
      %568 = vmatprep.subr.bf16.mxu0 0
      %569 = vmatpush1.bf16.msra.mxu0 0
      %570 = vmatprep.subr.bf16.mxu0 0
      %571 = vmatpush1.bf16.msra.mxu0 0
      %572 = vmatprep.subr.bf16.mxu0 0
      %573 = vmatpush1.bf16.msra.mxu0 0
      %574 = vmatprep.subr.bf16.mxu0 0
      %575 = vmatpush1.bf16.msra.mxu0 0
      %576 = vmatprep.subr.bf16.mxu0 0
      %577 = vmatpush1.bf16.msra.mxu0 0
      %578 = vmatprep.subr.bf16.mxu0 0
      %579 = vmatpush1.bf16.msra.mxu0 0
      %580 = vmatprep.subr.bf16.mxu0 0
      %581 = vmatpush1.bf16.msra.mxu0 0
      %582 = vmatprep.mubr.bf16.mxu0 0
      %583 = vmatmul.mubr.bf16.gmra.mrb[0].mxu0 %v548
      %v584 = vpop.f32.mrb[0].mxu0
      %v585 = vadd.f32 %v400, %v584
      %v586 = vpop.f32.mrb[0].mxu0
      %v587 = vadd.f32 %v402, %v586
      %v588 = vpop.f32.mrb[0].mxu0
      %v589 = vpop.f32.mrb[0].mxu0
      %590 = vdwg.mxu0
      %591 = vmatprep.subr.bf16.mxu0 %v510
      %592 = vmatpush1.bf16.msra.mxu0 %v509
      %593 = vmatprep.subr.bf16.mxu0 %v514
      %594 = vmatpush1.bf16.msra.mxu0 %v513
      %595 = vmatprep.subr.bf16.mxu0 %v518
      %596 = vmatpush1.bf16.msra.mxu0 %v517
      %597 = vmatprep.subr.bf16.mxu0 %v522
      %598 = vmatpush1.bf16.msra.mxu0 %v521
      %599 = vmatprep.subr.bf16.mxu0 %v526
      %600 = vmatpush1.bf16.msra.mxu0 %v525
      %601 = vmatprep.subr.bf16.mxu0 0
      %602 = vmatpush1.bf16.msra.mxu0 0
      %603 = vmatprep.subr.bf16.mxu0 0
      %604 = vmatpush1.bf16.msra.mxu0 0
      %605 = vmatprep.subr.bf16.mxu0 0
      %606 = vmatpush1.bf16.msra.mxu0 0
      %607 = vmatprep.subr.bf16.mxu0 0
      %608 = vmatpush1.bf16.msra.mxu0 0
      %609 = vmatprep.subr.bf16.mxu0 0
      %610 = vmatpush1.bf16.msra.mxu0 0
      %611 = vmatprep.subr.bf16.mxu0 0
      %612 = vmatpush1.bf16.msra.mxu0 0
      %613 = vmatprep.subr.bf16.mxu0 0
      %614 = vmatpush1.bf16.msra.mxu0 0
      %615 = vmatprep.subr.bf16.mxu0 0
      %616 = vmatpush1.bf16.msra.mxu0 0
      %617 = vmatprep.subr.bf16.mxu0 0
      %618 = vmatpush1.bf16.msra.mxu0 0
      %619 = vmatprep.subr.bf16.mxu0 0
      %620 = vmatpush1.bf16.msra.mxu0 0
      %621 = vmatprep.subr.bf16.mxu0 0
      %622 = vmatpush1.bf16.msra.mxu0 0
      %623 = vmatprep.mubr.bf16.mxu0 0
      %624 = vmatmul.mubr.bf16.gmra.mrb[0].mxu0 %v548
      %v625 = vpop.f32.mrb[0].mxu0
      %v626 = vadd.f32 %v441, %v625
      %v627 = vpop.f32.mrb[0].mxu0
      %v628 = vadd.f32 %v443, %v627
      %v629 = vpop.f32.mrb[0].mxu0
      %v630 = vpop.f32.mrb[0].mxu0
      %631 = vdwg.mxu0
      %s632 = sadd.s32 %s212, 2
      %s633 = scalar_lea.vmem %s191, %s632
      %v634 = vld [vmem:[%s633] sm:$0xff]
      %v635 = vpack.c.bf16 %v634, %v634
      %s636 = scalar_lea.vmem %s1, 320
      %v637 = vld [vmem:[%s636] sm:$0xff]
      %v638 = vld [vmem:[%s636 + $0x8] sm:$0xff]
      %v639 = vld [vmem:[%s636 + $0x10] sm:$0xff]
      %v640 = vld [vmem:[%s636 + $0x18] sm:$0xff]
      %v641 = vld [vmem:[%s636 + $0x20] sm:$0xff]
      %v642 = vld [vmem:[%s636 + $0x28] sm:$0xff]
      %v643 = vld [vmem:[%s636 + $0x30] sm:$0xff]
      %v644 = vld [vmem:[%s636 + $0x38] sm:$0xff]
      %v645 = vld [vmem:[%s636 + $0x40] sm:$0xff]
      %v646 = vld [vmem:[%s636 + $0x48] sm:$0xff]
      %v647 = vld [vmem:[%s636 + $0x50] sm:$0xff]
      %v648 = vld [vmem:[%s636 + $0x58] sm:$0xff]
      %v649 = vld [vmem:[%s636 + $0x60] sm:$0xff]
      %v650 = vld [vmem:[%s636 + $0x68] sm:$0xff]
      %v651 = vld [vmem:[%s636 + $0x70] sm:$0xff]
      %v652 = vld [vmem:[%s636 + $0x78] sm:$0xff]
      %v653 = vld [vmem:[%s636 + $0x80] sm:$0xff]
      %v654 = vld [vmem:[%s636 + $0x88] sm:$0xff]
      %v655 = vld [vmem:[%s636 + $0x90] sm:$0xff]
      %v656 = vld [vmem:[%s636 + $0x98] sm:$0xff]
      %v677 = vunpack.c.l.b16 %v637
      %v678 = vunpack.c.h.b16 %v637
      %v679 = vunpack.c.l.b16 %v638
      %v680 = vunpack.c.h.b16 %v638
      %v681 = vunpack.c.l.b16 %v639
      %v682 = vunpack.c.h.b16 %v639
      %v683 = vunpack.c.l.b16 %v640
      %v684 = vunpack.c.h.b16 %v640
      %v685 = vunpack.c.l.b16 %v641
      %v686 = vunpack.c.h.b16 %v641
      %v687 = vunpack.c.l.b16 %v642
      %v688 = vunpack.c.h.b16 %v642
      %v689 = vunpack.c.l.b16 %v643
      %v690 = vunpack.c.h.b16 %v643
      %v691 = vunpack.c.l.b16 %v644
      %v692 = vunpack.c.h.b16 %v644
      %v693 = vunpack.c.l.b16 %v645
      %v694 = vunpack.c.h.b16 %v645
      %v695 = vunpack.c.l.b16 %v646
      %v696 = vunpack.c.h.b16 %v646
      %v697 = vunpack.c.l.b16 %v647
      %v698 = vunpack.c.h.b16 %v647
      %v699 = vunpack.c.l.b16 %v648
      %v700 = vunpack.c.h.b16 %v648
      %v701 = vunpack.c.l.b16 %v649
      %v702 = vunpack.c.h.b16 %v649
      %v703 = vunpack.c.l.b16 %v650
      %v704 = vunpack.c.h.b16 %v650
      %v705 = vunpack.c.l.b16 %v651
      %v706 = vunpack.c.h.b16 %v651
      %v707 = vunpack.c.l.b16 %v652
      %v708 = vunpack.c.h.b16 %v652
      %v709 = vunpack.c.l.b16 %v653
      %v710 = vunpack.c.h.b16 %v653
      %v711 = vunpack.c.l.b16 %v654
      %v712 = vunpack.c.h.b16 %v654
      %v713 = vunpack.c.l.b16 %v655
      %v714 = vunpack.c.h.b16 %v655
      %v715 = vunpack.c.l.b16 %v656
      %v716 = vunpack.c.h.b16 %v656
      %v717 = vpack.c.b16 %v681, %v677
      %v718 = vpack.c.b16 %v682, %v678
      %v719 = vpack.c.b16 %v683, %v679
      %v720 = vpack.c.b16 %v684, %v680
      %v721 = vpack.c.b16 %v689, %v685
      %v722 = vpack.c.b16 %v690, %v686
      %v723 = vpack.c.b16 %v691, %v687
      %v724 = vpack.c.b16 %v692, %v688
      %v725 = vpack.c.b16 %v697, %v693
      %v726 = vpack.c.b16 %v698, %v694
      %v727 = vpack.c.b16 %v699, %v695
      %v728 = vpack.c.b16 %v700, %v696
      %v729 = vpack.c.b16 %v705, %v701
      %v730 = vpack.c.b16 %v706, %v702
      %v731 = vpack.c.b16 %v707, %v703
      %v732 = vpack.c.b16 %v708, %v704
      %v733 = vpack.c.b16 %v713, %v709
      %v734 = vpack.c.b16 %v714, %v710
      %v735 = vpack.c.b16 %v715, %v711
      %v736 = vpack.c.b16 %v716, %v712
      %v758 = vsel %vm361, %v635, 0
      %760 = vmatprep.subr.bf16.mxu0 %v718
      %761 = vmatpush1.bf16.msra.mxu0 %v717
      %762 = vmatprep.subr.bf16.mxu0 %v722
      %763 = vmatpush1.bf16.msra.mxu0 %v721
      %764 = vmatprep.subr.bf16.mxu0 %v726
      %765 = vmatpush1.bf16.msra.mxu0 %v725
      %766 = vmatprep.subr.bf16.mxu0 %v730
      %767 = vmatpush1.bf16.msra.mxu0 %v729
      %768 = vmatprep.subr.bf16.mxu0 %v734
      %769 = vmatpush1.bf16.msra.mxu0 %v733
      %770 = vmatprep.subr.bf16.mxu0 0
      %771 = vmatpush1.bf16.msra.mxu0 0
      %772 = vmatprep.subr.bf16.mxu0 0
      %773 = vmatpush1.bf16.msra.mxu0 0
      %774 = vmatprep.subr.bf16.mxu0 0
      %775 = vmatpush1.bf16.msra.mxu0 0
      %776 = vmatprep.subr.bf16.mxu0 0
      %777 = vmatpush1.bf16.msra.mxu0 0
      %778 = vmatprep.subr.bf16.mxu0 0
      %779 = vmatpush1.bf16.msra.mxu0 0
      %780 = vmatprep.subr.bf16.mxu0 0
      %781 = vmatpush1.bf16.msra.mxu0 0
      %782 = vmatprep.subr.bf16.mxu0 0
      %783 = vmatpush1.bf16.msra.mxu0 0
      %784 = vmatprep.subr.bf16.mxu0 0
      %785 = vmatpush1.bf16.msra.mxu0 0
      %786 = vmatprep.subr.bf16.mxu0 0
      %787 = vmatpush1.bf16.msra.mxu0 0
      %788 = vmatprep.subr.bf16.mxu0 0
      %789 = vmatpush1.bf16.msra.mxu0 0
      %790 = vmatprep.subr.bf16.mxu0 0
      %791 = vmatpush1.bf16.msra.mxu0 0
      %792 = vmatprep.mubr.bf16.mxu0 0
      %793 = vmatmul.mubr.bf16.gmra.mrb[0].mxu0 %v758
      %v794 = vpop.f32.mrb[0].mxu0
      %v795 = vadd.f32 0.0, %v794
      %v796 = vpop.f32.mrb[0].mxu0
      %v797 = vadd.f32 0.0, %v796
      %v798 = vpop.f32.mrb[0].mxu0
      %v799 = vpop.f32.mrb[0].mxu0
      %800 = vdwg.mxu0
      %801 = vmatprep.subr.bf16.mxu0 %v720
      %802 = vmatpush1.bf16.msra.mxu0 %v719
      %803 = vmatprep.subr.bf16.mxu0 %v724
      %804 = vmatpush1.bf16.msra.mxu0 %v723
      %805 = vmatprep.subr.bf16.mxu0 %v728
      %806 = vmatpush1.bf16.msra.mxu0 %v727
      %807 = vmatprep.subr.bf16.mxu0 %v732
      %808 = vmatpush1.bf16.msra.mxu0 %v731
      %809 = vmatprep.subr.bf16.mxu0 %v736
      %810 = vmatpush1.bf16.msra.mxu0 %v735
      %811 = vmatprep.subr.bf16.mxu0 0
      %812 = vmatpush1.bf16.msra.mxu0 0
      %813 = vmatprep.subr.bf16.mxu0 0
      %814 = vmatpush1.bf16.msra.mxu0 0
      %815 = vmatprep.subr.bf16.mxu0 0
      %816 = vmatpush1.bf16.msra.mxu0 0
      %817 = vmatprep.subr.bf16.mxu0 0
      %818 = vmatpush1.bf16.msra.mxu0 0
      %819 = vmatprep.subr.bf16.mxu0 0
      %820 = vmatpush1.bf16.msra.mxu0 0
      %821 = vmatprep.subr.bf16.mxu0 0
      %822 = vmatpush1.bf16.msra.mxu0 0
      %823 = vmatprep.subr.bf16.mxu0 0
      %824 = vmatpush1.bf16.msra.mxu0 0
      %825 = vmatprep.subr.bf16.mxu0 0
      %826 = vmatpush1.bf16.msra.mxu0 0
      %827 = vmatprep.subr.bf16.mxu0 0
      %828 = vmatpush1.bf16.msra.mxu0 0
      %829 = vmatprep.subr.bf16.mxu0 0
      %830 = vmatpush1.bf16.msra.mxu0 0
      %831 = vmatprep.subr.bf16.mxu0 0
      %832 = vmatpush1.bf16.msra.mxu0 0
      %833 = vmatprep.mubr.bf16.mxu0 0
      %834 = vmatmul.mubr.bf16.gmra.mrb[0].mxu0 %v758
      %v835 = vpop.f32.mrb[0].mxu0
      %v836 = vadd.f32 0.0, %v835
      %v837 = vpop.f32.mrb[0].mxu0
      %v838 = vadd.f32 0.0, %v837
      %v839 = vpop.f32.mrb[0].mxu0
      %v840 = vpop.f32.mrb[0].mxu0
      %841 = vdwg.mxu0
      %v842 = vadd.f32 %v585, %v795
      %v843 = vadd.f32 %v587, %v797
      %v844 = vadd.f32 %v626, %v836
      %v845 = vadd.f32 %v628, %v838
      %s846 = sadd.s32 %s212, 3
      %s847 = scalar_lea.vmem %s191, %s846
      %v848 = vld [vmem:[%s847] sm:$0xff]
      %v849 = vpack.c.bf16 %v848, %v848
      %s850 = scalar_lea.vmem %s1, 480
      %v851 = vld [vmem:[%s850] sm:$0xff]
      %v852 = vld [vmem:[%s850 + $0x8] sm:$0xff]
      %v853 = vld [vmem:[%s850 + $0x10] sm:$0xff]
      %v854 = vld [vmem:[%s850 + $0x18] sm:$0xff]
      %v855 = vld [vmem:[%s850 + $0x20] sm:$0xff]
      %v856 = vld [vmem:[%s850 + $0x28] sm:$0xff]
      %v857 = vld [vmem:[%s850 + $0x30] sm:$0xff]
      %v858 = vld [vmem:[%s850 + $0x38] sm:$0xff]
      %v859 = vld [vmem:[%s850 + $0x40] sm:$0xff]
      %v860 = vld [vmem:[%s850 + $0x48] sm:$0xff]
      %v861 = vld [vmem:[%s850 + $0x50] sm:$0xff]
      %v862 = vld [vmem:[%s850 + $0x58] sm:$0xff]
      %v863 = vld [vmem:[%s850 + $0x60] sm:$0xff]
      %v864 = vld [vmem:[%s850 + $0x68] sm:$0xff]
      %v865 = vld [vmem:[%s850 + $0x70] sm:$0xff]
      %v866 = vld [vmem:[%s850 + $0x78] sm:$0xff]
      %v867 = vld [vmem:[%s850 + $0x80] sm:$0xff]
      %v868 = vld [vmem:[%s850 + $0x88] sm:$0xff]
      %v869 = vld [vmem:[%s850 + $0x90] sm:$0xff]
      %v870 = vld [vmem:[%s850 + $0x98] sm:$0xff]
      %v891 = vunpack.c.l.b16 %v851
      %v892 = vunpack.c.h.b16 %v851
      %v893 = vunpack.c.l.b16 %v852
      %v894 = vunpack.c.h.b16 %v852
      %v895 = vunpack.c.l.b16 %v853
      %v896 = vunpack.c.h.b16 %v853
      %v897 = vunpack.c.l.b16 %v854
      %v898 = vunpack.c.h.b16 %v854
      %v899 = vunpack.c.l.b16 %v855
      %v900 = vunpack.c.h.b16 %v855
      %v901 = vunpack.c.l.b16 %v856
      %v902 = vunpack.c.h.b16 %v856
      %v903 = vunpack.c.l.b16 %v857
      %v904 = vunpack.c.h.b16 %v857
      %v905 = vunpack.c.l.b16 %v858
      %v906 = vunpack.c.h.b16 %v858
      %v907 = vunpack.c.l.b16 %v859
      %v908 = vunpack.c.h.b16 %v859
      %v909 = vunpack.c.l.b16 %v860
      %v910 = vunpack.c.h.b16 %v860
      %v911 = vunpack.c.l.b16 %v861
      %v912 = vunpack.c.h.b16 %v861
      %v913 = vunpack.c.l.b16 %v862
      %v914 = vunpack.c.h.b16 %v862
      %v915 = vunpack.c.l.b16 %v863
      %v916 = vunpack.c.h.b16 %v863
      %v917 = vunpack.c.l.b16 %v864
      %v918 = vunpack.c.h.b16 %v864
      %v919 = vunpack.c.l.b16 %v865
      %v920 = vunpack.c.h.b16 %v865
      %v921 = vunpack.c.l.b16 %v866
      %v922 = vunpack.c.h.b16 %v866
      %v923 = vunpack.c.l.b16 %v867
      %v924 = vunpack.c.h.b16 %v867
      %v925 = vunpack.c.l.b16 %v868
      %v926 = vunpack.c.h.b16 %v868
      %v927 = vunpack.c.l.b16 %v869
      %v928 = vunpack.c.h.b16 %v869
      %v929 = vunpack.c.l.b16 %v870
      %v930 = vunpack.c.h.b16 %v870
      %v931 = vpack.c.b16 %v895, %v891
      %v932 = vpack.c.b16 %v896, %v892
      %v933 = vpack.c.b16 %v897, %v893
      %v934 = vpack.c.b16 %v898, %v894
      %v935 = vpack.c.b16 %v903, %v899
      %v936 = vpack.c.b16 %v904, %v900
      %v937 = vpack.c.b16 %v905, %v901
      %v938 = vpack.c.b16 %v906, %v902
      %v939 = vpack.c.b16 %v911, %v907
      %v940 = vpack.c.b16 %v912, %v908
      %v941 = vpack.c.b16 %v913, %v909
      %v942 = vpack.c.b16 %v914, %v910
      %v943 = vpack.c.b16 %v919, %v915
      %v944 = vpack.c.b16 %v920, %v916
      %v945 = vpack.c.b16 %v921, %v917
      %v946 = vpack.c.b16 %v922, %v918
      %v947 = vpack.c.b16 %v927, %v923
      %v948 = vpack.c.b16 %v928, %v924
      %v949 = vpack.c.b16 %v929, %v925
      %v950 = vpack.c.b16 %v930, %v926
      %v972 = vsel %vm361, %v849, 0
      %974 = vmatprep.subr.bf16.mxu0 %v932
      %975 = vmatpush1.bf16.msra.mxu0 %v931
      %976 = vmatprep.subr.bf16.mxu0 %v936
      %977 = vmatpush1.bf16.msra.mxu0 %v935
      %978 = vmatprep.subr.bf16.mxu0 %v940
      %979 = vmatpush1.bf16.msra.mxu0 %v939
      %980 = vmatprep.subr.bf16.mxu0 %v944
      %981 = vmatpush1.bf16.msra.mxu0 %v943
      %982 = vmatprep.subr.bf16.mxu0 %v948
      %983 = vmatpush1.bf16.msra.mxu0 %v947
      %984 = vmatprep.subr.bf16.mxu0 0
      %985 = vmatpush1.bf16.msra.mxu0 0
      %986 = vmatprep.subr.bf16.mxu0 0
      %987 = vmatpush1.bf16.msra.mxu0 0
      %988 = vmatprep.subr.bf16.mxu0 0
      %989 = vmatpush1.bf16.msra.mxu0 0
      %990 = vmatprep.subr.bf16.mxu0 0
      %991 = vmatpush1.bf16.msra.mxu0 0
      %992 = vmatprep.subr.bf16.mxu0 0
      %993 = vmatpush1.bf16.msra.mxu0 0
      %994 = vmatprep.subr.bf16.mxu0 0
      %995 = vmatpush1.bf16.msra.mxu0 0
      %996 = vmatprep.subr.bf16.mxu0 0
      %997 = vmatpush1.bf16.msra.mxu0 0
      %998 = vmatprep.subr.bf16.mxu0 0
      %999 = vmatpush1.bf16.msra.mxu0 0
      %1000 = vmatprep.subr.bf16.mxu0 0
      %1001 = vmatpush1.bf16.msra.mxu0 0
      %1002 = vmatprep.subr.bf16.mxu0 0
      %1003 = vmatpush1.bf16.msra.mxu0 0
      %1004 = vmatprep.subr.bf16.mxu0 0
      %1005 = vmatpush1.bf16.msra.mxu0 0
      %1006 = vmatprep.mubr.bf16.mxu0 0
      %1007 = vmatmul.mubr.bf16.gmra.mrb[0].mxu0 %v972
      %v1008 = vpop.f32.mrb[0].mxu0
      %v1009 = vadd.f32 0.0, %v1008
      %v1010 = vpop.f32.mrb[0].mxu0
      %v1011 = vadd.f32 0.0, %v1010
      %v1012 = vpop.f32.mrb[0].mxu0
      %v1013 = vpop.f32.mrb[0].mxu0
      %1014 = vdwg.mxu0
      %1015 = vmatprep.subr.bf16.mxu0 %v934
      %1016 = vmatpush1.bf16.msra.mxu0 %v933
      %1017 = vmatprep.subr.bf16.mxu0 %v938
      %1018 = vmatpush1.bf16.msra.mxu0 %v937
      %1019 = vmatprep.subr.bf16.mxu0 %v942
      %1020 = vmatpush1.bf16.msra.mxu0 %v941
      %1021 = vmatprep.subr.bf16.mxu0 %v946
      %1022 = vmatpush1.bf16.msra.mxu0 %v945
      %1023 = vmatprep.subr.bf16.mxu0 %v950
      %1024 = vmatpush1.bf16.msra.mxu0 %v949
      %1025 = vmatprep.subr.bf16.mxu0 0
      %1026 = vmatpush1.bf16.msra.mxu0 0
      %1027 = vmatprep.subr.bf16.mxu0 0
      %1028 = vmatpush1.bf16.msra.mxu0 0
      %1029 = vmatprep.subr.bf16.mxu0 0
      %1030 = vmatpush1.bf16.msra.mxu0 0
      %1031 = vmatprep.subr.bf16.mxu0 0
      %1032 = vmatpush1.bf16.msra.mxu0 0
      %1033 = vmatprep.subr.bf16.mxu0 0
      %1034 = vmatpush1.bf16.msra.mxu0 0
      %1035 = vmatprep.subr.bf16.mxu0 0
      %1036 = vmatpush1.bf16.msra.mxu0 0
      %1037 = vmatprep.subr.bf16.mxu0 0
      %1038 = vmatpush1.bf16.msra.mxu0 0
      %1039 = vmatprep.subr.bf16.mxu0 0
      %1040 = vmatpush1.bf16.msra.mxu0 0
      %1041 = vmatprep.subr.bf16.mxu0 0
      %1042 = vmatpush1.bf16.msra.mxu0 0
      %1043 = vmatprep.subr.bf16.mxu0 0
      %1044 = vmatpush1.bf16.msra.mxu0 0
      %1045 = vmatprep.subr.bf16.mxu0 0
      %1046 = vmatpush1.bf16.msra.mxu0 0
      %1047 = vmatprep.mubr.bf16.mxu0 0
      %1048 = vmatmul.mubr.bf16.gmra.mrb[0].mxu0 %v972
      %v1049 = vpop.f32.mrb[0].mxu0
      %v1050 = vadd.f32 0.0, %v1049
      %v1051 = vpop.f32.mrb[0].mxu0
      %v1052 = vadd.f32 0.0, %v1051
      %v1053 = vpop.f32.mrb[0].mxu0
      %v1054 = vpop.f32.mrb[0].mxu0
      %1055 = vdwg.mxu0
      %v1056 = vadd.f32 %v842, %v1009
      %v1057 = vadd.f32 %v843, %v1011
      %v1058 = vadd.f32 %v844, %v1050
      %v1059 = vadd.f32 %v845, %v1052
      %s1060 = sadd.s32 %s212, 4
      %s1061 = scalar_lea.vmem %s191, %s1060
      %v1062 = vld [vmem:[%s1061] sm:$0xff]
      %v1063 = vpack.c.bf16 %v1062, %v1062
      %s1064 = scalar_lea.vmem %s1, 640
      %v1065 = vld [vmem:[%s1064] sm:$0xff]
      %v1066 = vld [vmem:[%s1064 + $0x8] sm:$0xff]
      %v1067 = vld [vmem:[%s1064 + $0x10] sm:$0xff]
      %v1068 = vld [vmem:[%s1064 + $0x18] sm:$0xff]
      %v1069 = vld [vmem:[%s1064 + $0x20] sm:$0xff]
      %v1070 = vld [vmem:[%s1064 + $0x28] sm:$0xff]
      %v1071 = vld [vmem:[%s1064 + $0x30] sm:$0xff]
      %v1072 = vld [vmem:[%s1064 + $0x38] sm:$0xff]
      %v1073 = vld [vmem:[%s1064 + $0x40] sm:$0xff]
      %v1074 = vld [vmem:[%s1064 + $0x48] sm:$0xff]
      %v1075 = vld [vmem:[%s1064 + $0x50] sm:$0xff]
      %v1076 = vld [vmem:[%s1064 + $0x58] sm:$0xff]
      %v1077 = vld [vmem:[%s1064 + $0x60] sm:$0xff]
      %v1078 = vld [vmem:[%s1064 + $0x68] sm:$0xff]
      %v1079 = vld [vmem:[%s1064 + $0x70] sm:$0xff]
      %v1080 = vld [vmem:[%s1064 + $0x78] sm:$0xff]
      %v1081 = vld [vmem:[%s1064 + $0x80] sm:$0xff]
      %v1082 = vld [vmem:[%s1064 + $0x88] sm:$0xff]
      %v1083 = vld [vmem:[%s1064 + $0x90] sm:$0xff]
      %v1084 = vld [vmem:[%s1064 + $0x98] sm:$0xff]
      %v1105 = vunpack.c.l.b16 %v1065
      %v1106 = vunpack.c.h.b16 %v1065
      %v1107 = vunpack.c.l.b16 %v1066
      %v1108 = vunpack.c.h.b16 %v1066
      %v1109 = vunpack.c.l.b16 %v1067
      %v1110 = vunpack.c.h.b16 %v1067
      %v1111 = vunpack.c.l.b16 %v1068
      %v1112 = vunpack.c.h.b16 %v1068
      %v1113 = vunpack.c.l.b16 %v1069
      %v1114 = vunpack.c.h.b16 %v1069
      %v1115 = vunpack.c.l.b16 %v1070
      %v1116 = vunpack.c.h.b16 %v1070
      %v1117 = vunpack.c.l.b16 %v1071
      %v1118 = vunpack.c.h.b16 %v1071
      %v1119 = vunpack.c.l.b16 %v1072
      %v1120 = vunpack.c.h.b16 %v1072
      %v1121 = vunpack.c.l.b16 %v1073
      %v1122 = vunpack.c.h.b16 %v1073
      %v1123 = vunpack.c.l.b16 %v1074
      %v1124 = vunpack.c.h.b16 %v1074
      %v1125 = vunpack.c.l.b16 %v1075
      %v1126 = vunpack.c.h.b16 %v1075
      %v1127 = vunpack.c.l.b16 %v1076
      %v1128 = vunpack.c.h.b16 %v1076
      %v1129 = vunpack.c.l.b16 %v1077
      %v1130 = vunpack.c.h.b16 %v1077
      %v1131 = vunpack.c.l.b16 %v1078
      %v1132 = vunpack.c.h.b16 %v1078
      %v1133 = vunpack.c.l.b16 %v1079
      %v1134 = vunpack.c.h.b16 %v1079
      %v1135 = vunpack.c.l.b16 %v1080
      %v1136 = vunpack.c.h.b16 %v1080
      %v1137 = vunpack.c.l.b16 %v1081
      %v1138 = vunpack.c.h.b16 %v1081
      %v1139 = vunpack.c.l.b16 %v1082
      %v1140 = vunpack.c.h.b16 %v1082
      %v1141 = vunpack.c.l.b16 %v1083
      %v1142 = vunpack.c.h.b16 %v1083
      %v1143 = vunpack.c.l.b16 %v1084
      %v1144 = vunpack.c.h.b16 %v1084
      %v1145 = vpack.c.b16 %v1109, %v1105
      %v1146 = vpack.c.b16 %v1110, %v1106
      %v1147 = vpack.c.b16 %v1111, %v1107
      %v1148 = vpack.c.b16 %v1112, %v1108
      %v1149 = vpack.c.b16 %v1117, %v1113
      %v1150 = vpack.c.b16 %v1118, %v1114
      %v1151 = vpack.c.b16 %v1119, %v1115
      %v1152 = vpack.c.b16 %v1120, %v1116
      %v1153 = vpack.c.b16 %v1125, %v1121
      %v1154 = vpack.c.b16 %v1126, %v1122
      %v1155 = vpack.c.b16 %v1127, %v1123
      %v1156 = vpack.c.b16 %v1128, %v1124
      %v1157 = vpack.c.b16 %v1133, %v1129
      %v1158 = vpack.c.b16 %v1134, %v1130
      %v1159 = vpack.c.b16 %v1135, %v1131
      %v1160 = vpack.c.b16 %v1136, %v1132
      %v1161 = vpack.c.b16 %v1141, %v1137
      %v1162 = vpack.c.b16 %v1142, %v1138
      %v1163 = vpack.c.b16 %v1143, %v1139
      %v1164 = vpack.c.b16 %v1144, %v1140
      %v1186 = vsel %vm361, %v1063, 0
      %1188 = vmatprep.subr.bf16.mxu0 %v1146
      %1189 = vmatpush1.bf16.msra.mxu0 %v1145
      %1190 = vmatprep.subr.bf16.mxu0 %v1150
      %1191 = vmatpush1.bf16.msra.mxu0 %v1149
      %1192 = vmatprep.subr.bf16.mxu0 %v1154
      %1193 = vmatpush1.bf16.msra.mxu0 %v1153
      %1194 = vmatprep.subr.bf16.mxu0 %v1158
      %1195 = vmatpush1.bf16.msra.mxu0 %v1157
      %1196 = vmatprep.subr.bf16.mxu0 %v1162
      %1197 = vmatpush1.bf16.msra.mxu0 %v1161
      %1198 = vmatprep.subr.bf16.mxu0 0
      %1199 = vmatpush1.bf16.msra.mxu0 0
      %1200 = vmatprep.subr.bf16.mxu0 0
      %1201 = vmatpush1.bf16.msra.mxu0 0
      %1202 = vmatprep.subr.bf16.mxu0 0
      %1203 = vmatpush1.bf16.msra.mxu0 0
      %1204 = vmatprep.subr.bf16.mxu0 0
      %1205 = vmatpush1.bf16.msra.mxu0 0
      %1206 = vmatprep.subr.bf16.mxu0 0
      %1207 = vmatpush1.bf16.msra.mxu0 0
      %1208 = vmatprep.subr.bf16.mxu0 0
      %1209 = vmatpush1.bf16.msra.mxu0 0
      %1210 = vmatprep.subr.bf16.mxu0 0
      %1211 = vmatpush1.bf16.msra.mxu0 0
      %1212 = vmatprep.subr.bf16.mxu0 0
      %1213 = vmatpush1.bf16.msra.mxu0 0
      %1214 = vmatprep.subr.bf16.mxu0 0
      %1215 = vmatpush1.bf16.msra.mxu0 0
      %1216 = vmatprep.subr.bf16.mxu0 0
      %1217 = vmatpush1.bf16.msra.mxu0 0
      %1218 = vmatprep.subr.bf16.mxu0 0
      %1219 = vmatpush1.bf16.msra.mxu0 0
      %1220 = vmatprep.mubr.bf16.mxu0 0
      %1221 = vmatmul.mubr.bf16.gmra.mrb[0].mxu0 %v1186
      %v1222 = vpop.f32.mrb[0].mxu0
      %v1223 = vadd.f32 0.0, %v1222
      %v1224 = vpop.f32.mrb[0].mxu0
      %v1225 = vadd.f32 0.0, %v1224
      %v1226 = vpop.f32.mrb[0].mxu0
      %v1227 = vpop.f32.mrb[0].mxu0
      %1228 = vdwg.mxu0
      %1229 = vmatprep.subr.bf16.mxu0 %v1148
      %1230 = vmatpush1.bf16.msra.mxu0 %v1147
      %1231 = vmatprep.subr.bf16.mxu0 %v1152
      %1232 = vmatpush1.bf16.msra.mxu0 %v1151
      %1233 = vmatprep.subr.bf16.mxu0 %v1156
      %1234 = vmatpush1.bf16.msra.mxu0 %v1155
      %1235 = vmatprep.subr.bf16.mxu0 %v1160
      %1236 = vmatpush1.bf16.msra.mxu0 %v1159
      %1237 = vmatprep.subr.bf16.mxu0 %v1164
      %1238 = vmatpush1.bf16.msra.mxu0 %v1163
      %1239 = vmatprep.subr.bf16.mxu0 0
      %1240 = vmatpush1.bf16.msra.mxu0 0
      %1241 = vmatprep.subr.bf16.mxu0 0
      %1242 = vmatpush1.bf16.msra.mxu0 0
      %1243 = vmatprep.subr.bf16.mxu0 0
      %1244 = vmatpush1.bf16.msra.mxu0 0
      %1245 = vmatprep.subr.bf16.mxu0 0
      %1246 = vmatpush1.bf16.msra.mxu0 0
      %1247 = vmatprep.subr.bf16.mxu0 0
      %1248 = vmatpush1.bf16.msra.mxu0 0
      %1249 = vmatprep.subr.bf16.mxu0 0
      %1250 = vmatpush1.bf16.msra.mxu0 0
      %1251 = vmatprep.subr.bf16.mxu0 0
      %1252 = vmatpush1.bf16.msra.mxu0 0
      %1253 = vmatprep.subr.bf16.mxu0 0
      %1254 = vmatpush1.bf16.msra.mxu0 0
      %1255 = vmatprep.subr.bf16.mxu0 0
      %1256 = vmatpush1.bf16.msra.mxu0 0
      %1257 = vmatprep.subr.bf16.mxu0 0
      %1258 = vmatpush1.bf16.msra.mxu0 0
      %1259 = vmatprep.subr.bf16.mxu0 0
      %1260 = vmatpush1.bf16.msra.mxu0 0
      %1261 = vmatprep.mubr.bf16.mxu0 0
      %1262 = vmatmul.mubr.bf16.gmra.mrb[0].mxu0 %v1186
      %v1263 = vpop.f32.mrb[0].mxu0
      %v1264 = vadd.f32 0.0, %v1263
      %v1265 = vpop.f32.mrb[0].mxu0
      %v1266 = vadd.f32 0.0, %v1265
      %v1267 = vpop.f32.mrb[0].mxu0
      %v1268 = vpop.f32.mrb[0].mxu0
      %1269 = vdwg.mxu0
      %v1270 = vadd.f32 %v1056, %v1223
      %v1271 = vadd.f32 %v1057, %v1225
      %v1272 = vadd.f32 %v1058, %v1264
      %v1273 = vadd.f32 %v1059, %v1266
      %1274 = vst [vmem:[%s200] sm:$0xff] %v1270
      %1275 = vst [vmem:[%s200 + $0x8] sm:$0xff] %v1271
      %1276 = vst [vmem:[%s200 + $0x10] sm:$0xff] %v1272
      %1277 = vst [vmem:[%s200 + $0x18] sm:$0xff] %v1273
      %v1278 = vld [vmem:[%s205] ss:$2 sm:$0xf]
      %v1279 = vrot.slane %v1270, 4
      %v1280 = vadd.f32 %v1270, %v1279
      %v1281 = vrot.slane %v1280, 2
      %v1282 = vadd.f32 %v1280, %v1281
      %v1283 = vrot.slane %v1282, 1
      %v1284 = vadd.f32 %v1282, %v1283
      %v1285 = vrot.slane %v1271, 4
      %v1286 = vadd.f32 %v1271, %v1285
      %v1287 = vrot.slane %v1286, 2
      %v1288 = vadd.f32 %v1286, %v1287
      %v1289 = vrot.slane %v1288, 1
      %v1290 = vadd.f32 %v1288, %v1289
      %v1291 = vrot.slane %v1272, 4
      %v1292 = vadd.f32 %v1272, %v1291
      %v1293 = vrot.slane %v1292, 2
      %v1294 = vadd.f32 %v1292, %v1293
      %v1295 = vrot.slane %v1294, 1
      %v1296 = vadd.f32 %v1294, %v1295
      %v1297 = vrot.slane %v1273, 4
      %v1298 = vadd.f32 %v1273, %v1297
      %v1299 = vrot.slane %v1298, 2
      %v1300 = vadd.f32 %v1298, %v1299
      %v1301 = vrot.slane %v1300, 1
      %v1302 = vadd.f32 %v1300, %v1301
      %v1307 = vcombine.low %v1284, %v1290
      %v1308 = vcombine.low %v1296, %v1302
      %v1310 = vunpack.c.l.s4 1966171168
      %v1311 = vunpack.c.0.s8 %v1310
      %v1312 = vlaneseq
      %v1313 = vshrl.u32 %v1312, 7
      %v1314 = vsub.s32 %v1311, %v1313
      %v1315 = vrot.slane %v1307, %v1314
      %v1317 = vunpack.c.l.s4 1966171168
      %v1318 = vunpack.c.0.s8 %v1317
      %v1319 = vlaneseq
      %v1320 = vshrl.u32 %v1319, 7
      %v1321 = vsub.s32 %v1318, %v1320
      %v1322 = vrot.slane %v1308, %v1321
      %v1323 = vcombine.low %v1315, %v1322
      %v1325 = vunpack.c.l.s4 1966171168
      %v1326 = vunpack.c.0.s8 %v1325
      %v1327 = vlaneseq
      %v1328 = vshrl.u32 %v1327, 7
      %v1329 = vsub.s32 %v1326, %v1328
      %v1330 = vrot.slane %v1323, %v1329
      %v1332 = vadd.f32 %v1278, %v1330
      %v1333 = vlaneseq
      %vm1334 = vcmp.ge.s32.totalorder %v1333, 0
      %vm1335 = vcmp.lt.s32.totalorder %v1333, 512
      %vm1336 = vmand %vm1334, %vm1335
      %1337 = vst.msk [vmem:[%s205] ss:$2 sm:$0xf] %vm1336, %v1332
      %s1338 = scalar_lea.vmem %s205, 1
      %v1339 = vld [vmem:[%s1338] ss:$2 sm:$0xf]
      %v1340 = vmul.f32 %v1270, %v1270
      %v1341 = vmul.f32 %v1271, %v1271
      %v1342 = vmul.f32 %v1272, %v1272
      %v1343 = vmul.f32 %v1273, %v1273
      %v1344 = vrot.slane %v1340, 4
      %v1345 = vadd.f32 %v1340, %v1344
      %v1346 = vrot.slane %v1345, 2
      %v1347 = vadd.f32 %v1345, %v1346
      %v1348 = vrot.slane %v1347, 1
      %v1349 = vadd.f32 %v1347, %v1348
      %v1350 = vrot.slane %v1341, 4
      %v1351 = vadd.f32 %v1341, %v1350
      %v1352 = vrot.slane %v1351, 2
      %v1353 = vadd.f32 %v1351, %v1352
      %v1354 = vrot.slane %v1353, 1
      %v1355 = vadd.f32 %v1353, %v1354
      %v1356 = vrot.slane %v1342, 4
      %v1357 = vadd.f32 %v1342, %v1356
      %v1358 = vrot.slane %v1357, 2
      %v1359 = vadd.f32 %v1357, %v1358
      %v1360 = vrot.slane %v1359, 1
      %v1361 = vadd.f32 %v1359, %v1360
      %v1362 = vrot.slane %v1343, 4
      %v1363 = vadd.f32 %v1343, %v1362
      %v1364 = vrot.slane %v1363, 2
      %v1365 = vadd.f32 %v1363, %v1364
      %v1366 = vrot.slane %v1365, 1
      %v1367 = vadd.f32 %v1365, %v1366
      %v1372 = vcombine.low %v1349, %v1355
      %v1373 = vcombine.low %v1361, %v1367
      %v1375 = vunpack.c.l.s4 1966171168
      %v1376 = vunpack.c.0.s8 %v1375
      %v1377 = vlaneseq
      %v1378 = vshrl.u32 %v1377, 7
      %v1379 = vsub.s32 %v1376, %v1378
      %v1380 = vrot.slane %v1372, %v1379
      %v1382 = vunpack.c.l.s4 1966171168
      %v1383 = vunpack.c.0.s8 %v1382
      %v1384 = vlaneseq
      %v1385 = vshrl.u32 %v1384, 7
      %v1386 = vsub.s32 %v1383, %v1385
      %v1387 = vrot.slane %v1373, %v1386
      %v1388 = vcombine.low %v1380, %v1387
      %v1390 = vunpack.c.l.s4 1966171168
      %v1391 = vunpack.c.0.s8 %v1390
      %v1392 = vlaneseq
      %v1393 = vshrl.u32 %v1392, 7
      %v1394 = vsub.s32 %v1391, %v1393
      %v1395 = vrot.slane %v1388, %v1394
      %v1397 = vadd.f32 %v1339, %v1395
      %1398 = vst.msk [vmem:[%s1338] ss:$2 sm:$0xf] %vm1336, %v1397
      %p1399 = scmp.lt.s32.totalorder %s19, 1
      %s1400 = scalar_select %p1399, %s19, 1
      %p1401 = scmp.lt.s32.totalorder %s20, 1
      %s1402 = scalar_select %p1401, %s20, 1
      %s1403 = smul.addr %s1402, 4
      %s1404 = smul.addr %s1400, 8
      %s1405 = sadd.s32 %s1403, %s1404
      %s1406 = smul.addr %s1405, 8
      %s1407 = scalar_lea.vmem %s2, %s1406
      %p1408 = scmp.lt.s32.totalorder %s19, 1
      %s1409 = scalar_select %p1408, %s19, 1
      %s1410 = smul.addr %s1409, 4
      %s1411 = smul.addr %s1410, 2
      %s1412 = scalar_lea.vmem %s3, %s1411
      // Predicated region
      $region33: #{variable_filter_size_up_block.2} parent=27 // pred_check
        %p1413 = pneg %p94
      $region34: #{variable_filter_size_up_block.2} parent=27 // pred_check_branch
        %1415 = sbr.rel (%p1413) target = $region36
      $region35: #{variable_filter_size_up_block.2} parent=27 // pred_region
        _
      $region36: #{variable_filter_size_up_block.2} parent=27 // pred_fallthru
        _
      // Predicated region
      $region37: #{variable_filter_size_up_block.2} parent=27 // pred_check
        %p1416 = pneg %p120
      $region38: #{variable_filter_size_up_block.2} parent=27 // pred_check_branch
        %1418 = sbr.rel (%p1416) target = $region40
      $region39: #{variable_filter_size_up_block.2} parent=27 // pred_region
        _
      $region40: #{variable_filter_size_up_block.2} parent=27 // pred_fallthru
        _
    $region28: #{variable_filter_size_up_block.2} parent=5 // pred_fallthru
      _
    %p1419 = scmp.le.s32.totalorder 2, %s10
    // Predicated region
    $region41: #{variable_filter_size_up_block.2} parent=5 // pred_check
      %p1420 = pneg %p1419
    $region42: #{variable_filter_size_up_block.2} parent=5 // pred_check_branch
      %1422 = sbr.rel (%p1420) target = $region44
    $region43: #{variable_filter_size_up_block.2} parent=5 // pred_region
      %s1423 = ssub.s32 %s10, 2
      // Predicated region
      $region45: #{variable_filter_size_up_block.2} parent=43 // pred_check
        %p1424 = pneg %p100
      $region46: #{variable_filter_size_up_block.2} parent=43 // pred_check_branch
        %1426 = sbr.rel (%p1424) target = $region48
      $region47: #{variable_filter_size_up_block.2} parent=43 // pred_region
        %p1427 = scmp.lt.s32.totalorder %s21, 1
        %s1428 = scalar_select %p1427, %s21, 1
        %p1429 = scmp.lt.s32.totalorder %s22, 1
        %s1430 = scalar_select %p1429, %s22, 1
        %s1431 = smul.addr %s1430, 4
        %s1432 = smul.addr %s1428, 8
        %s1433 = sadd.s32 %s1431, %s1432
        %s1434 = smul.addr %s1433, 8
        %s1435 = scalar_lea.vmem %s2, %s1434
      $region48: #{variable_filter_size_up_block.2} parent=43 // pred_fallthru
        _
      // Predicated region
      $region49: #{variable_filter_size_up_block.2} parent=43 // pred_check
        %p1436 = pneg %p126
      $region50: #{variable_filter_size_up_block.2} parent=43 // pred_check_branch
        %1438 = sbr.rel (%p1436) target = $region52
      $region51: #{variable_filter_size_up_block.2} parent=43 // pred_region
        %p1439 = scmp.lt.s32.totalorder %s21, 1
        %s1440 = scalar_select %p1439, %s21, 1
        %s1441 = smul.addr %s1440, 4
        %s1442 = smul.addr %s1441, 2
        %s1443 = scalar_lea.vmem %s3, %s1442
      $region52: #{variable_filter_size_up_block.2} parent=43 // pred_fallthru
        _
    $region44: #{variable_filter_size_up_block.2} parent=5 // pred_fallthru
      _
  $region6: #{variable_filter_size_up_block.2} parent=0 // loop_footer
    %s14 = sadd.s32 1, %s10
  $region7: #{variable_filter_size_up_block.2} parent=0 // loop_footer_branch
    %9 = sbr.rel target = $region3
  $region8: #{variable_filter_size_up_block.2} parent=0 // loop_exit
    _

</llo_original>
